<compile_context>
chip_gen: v7x
topology: tpu7x:2x2x1
jax: 0.10.0
libtpu: 0.0.40
codegen_flags: <defaults>
</compile_context>

<pallas_src>
import functools

import jax
import jax.numpy as jnp
from jax.experimental import pallas as pl
from jax.experimental.pallas import tpu as pltpu


# ---------------------------------------------------------------------------
# Hardware-derived sizing
# ---------------------------------------------------------------------------

def _tpu_vmem_capacity():
    try:
        return int(pltpu.get_tpu_info().vmem_capacity_bytes)
    except Exception:  # conservative fallback (v7x per-core VMEM)
        return 64 * 1024 * 1024


def _pick_tile_rows(H, bytes_per_row, budget_bytes):
    """Largest multiple-of-8 divisor of H whose per-step working set fits the budget."""
    if H % 8 != 0:
        return H  # TODO(synk): ragged H needs masked edge tiles; take whole rows.
    best = 8
    for t in range(8, H + 1, 8):
        if H % t == 0 and t * bytes_per_row <= budget_bytes:
            best = t
    return best


# ---------------------------------------------------------------------------
# Kernels
# ---------------------------------------------------------------------------

def _conv3x3_kernel(x_ref, xt_ref, xb_ref, w_ref, ps_ref, pb_ref,
                    y_ref, st_ref, *, fuse_pre, tile_h):
    """One row-tile of Conv3x3(pad=1, bias=0) + per-tile BatchNorm partial sums.

    Flat lane-dense layout: rows are (W*Cin,) vectors, outputs (W*Cout,) vectors.

    x_ref : (1, TILE_H, W*Cin)     main rows of this tile
    xt_ref: (1, 8, W*Cin)          8-row block containing the row above (clamped)
    xb_ref: (1, 8, W*Cin)          8-row block containing the row below (clamped)
    w_ref : (3, W*Cin, W*Cout)     banded weights (kw shifts + zero padding folded in), bf16
    ps_ref: (1, W*Cin)             fused input affine scale (prev-block BN), f32
    pb_ref: (1, W*Cin)             fused input affine shift, f32
    y_ref : (1, TILE_H, W*Cout)    raw conv output (pre-BN), bf16
    st_ref: (1, 1, 2, W*Cout)      per-tile (sum, sum-of-squares), f32, flat layout
    """
    r = pl.program_id(1)
    last_r = pl.num_programs(1) - 1

    xm = x_ref[0].astype(jnp.float32)            # (TILE_H, W*Cin)
    xt = xt_ref[0, 7:8, :].astype(jnp.float32)   # row r*TILE_H - 1 (garbage at top edge)
    xb = xb_ref[0, 0:1, :].astype(jnp.float32)   # row (r+1)*TILE_H (garbage at bottom edge)

    if fuse_pre:
        # Fused BatchNorm(previous block) + ReLU on this conv's input (f32 math).
        s = ps_ref[...]
        b = pb_ref[...]
        xm = jnp.maximum(xm * s + b, 0.0)
        xt = jnp.maximum(xt * s + b, 0.0)
        xb = jnp.maximum(xb * s + b, 0.0)

    # 'zeros' conv padding: rows outside the image become literal zeros
    # (applied AFTER the fused activation, matching PyTorch padding semantics).
    xt = jnp.where(r > 0, xt, 0.0)
    xb = jnp.where(r < last_r, xb, 0.0)

    # (TILE_H + 2, W*Cin) row window, cast once to bf16 for the MXU.
    rows = jnp.concatenate([xt, xm, xb], axis=0).astype(jnp.bfloat16)

    # 3x3 conv = 3 matmuls (one per kh tap); kw shifts live inside the banded weights.
    nout = w_ref.shape[-1]
    acc = jnp.zeros((tile_h, nout), jnp.float32)
    for kh in range(3):
        acc += jnp.dot(rows[kh:kh + tile_h, :], w_ref[kh],
                       preferred_element_type=jnp.float32)

    y_ref[0] = acc.astype(y_ref.dtype)

    # Per-tile BatchNorm partials from the f32 accumulator, kept in the flat
    # (W*Cout) layout so the store is lane-dense; W is reduced outside.
    s0 = jnp.sum(acc, axis=0, keepdims=True)
    s1 = jnp.sum(acc * acc, axis=0, keepdims=True)
    st_ref[0, 0] = jnp.concatenate([s0, s1], axis=0)


def _affine_relu_kernel(y_ref, s_ref, b_ref, o_ref):
    """Tiled elementwise y*scale + shift -> ReLU (final BN2 + ReLU), f32 math."""
    y = y_ref[0].astype(jnp.float32)
    o_ref[0] = jnp.maximum(y * s_ref[...] + b_ref[...], 0.0)


# ---------------------------------------------------------------------------
# pallas_call wrappers
# ---------------------------------------------------------------------------

def _conv_block(x, wb, pre_scale, pre_shift, *, fuse_pre, tile_h, vmem_limit):
    N, H, K = x.shape
    nout = wb.shape[-1]
    R = H // tile_h
    tb = tile_h // 8          # tile height in 8-row halo blocks
    hb = H // 8               # image height in 8-row halo blocks

    kernel = functools.partial(_conv3x3_kernel, fuse_pre=fuse_pre, tile_h=tile_h)

    tile_map = lambda n, r: (n, r, 0)
    top_map = lambda n, r: (n, jnp.maximum(r * tb - 1, 0), 0)
    bot_map = lambda n, r: (n, jnp.minimum((r + 1) * tb, hb - 1), 0)
    wmap = lambda n, r: (0, 0, 0)
    cmap = lambda n, r: (0, 0)

    return pl.pallas_call(
        kernel,
        out_shape=(jax.ShapeDtypeStruct((N, H, nout), jnp.bfloat16),
                   jax.ShapeDtypeStruct((N, R, 2, nout), jnp.float32)),
        grid=(N, R),
        in_specs=[
            pl.BlockSpec((1, tile_h, K), tile_map),   # main rows
            pl.BlockSpec((1, 8, K), top_map),         # halo block above (aligned)
            pl.BlockSpec((1, 8, K), bot_map),         # halo block below (aligned)
            pl.BlockSpec((3, K, nout), wmap),         # banded weights: VMEM resident
            pl.BlockSpec((1, K), cmap),               # fused scale: resident
            pl.BlockSpec((1, K), cmap),               # fused shift: resident
        ],
        out_specs=(
            pl.BlockSpec((1, tile_h, nout), tile_map),
            pl.BlockSpec((1, 1, 2, nout), lambda n, r: (n, r, 0, 0)),
        ),
        compiler_params=pltpu.CompilerParams(
            dimension_semantics=("parallel", "parallel"),
            vmem_limit_bytes=vmem_limit),
    )(x, x, x, wb, pre_scale, pre_shift)


def _affine_relu(y, scale, shift, *, tile_h, vmem_limit):
    N, H, K = y.shape
    R = H // tile_h
    tile_map = lambda n, r: (n, r, 0)
    cmap = lambda n, r: (0, 0)
    return pl.pallas_call(
        _affine_relu_kernel,
        out_shape=jax.ShapeDtypeStruct((N, H, K), jnp.float32),
        grid=(N, R),
        in_specs=[pl.BlockSpec((1, tile_h, K), tile_map),
                  pl.BlockSpec((1, K), cmap),
                  pl.BlockSpec((1, K), cmap)],
        out_specs=pl.BlockSpec((1, tile_h, K), tile_map),
        compiler_params=pltpu.CompilerParams(
            dimension_semantics=("parallel", "parallel"),
            vmem_limit_bytes=vmem_limit),
    )(y, scale, shift)


# ---------------------------------------------------------------------------
# Wrapper-side helpers (plain JAX, tiny tensors)
# ---------------------------------------------------------------------------

def _banded_weights(w9, width):
    """(3,3,Cin,Cout) conv weights -> (3, W*Cin, W*Cout) block-banded matrices.

    Wb[kh][w_in*Cin+ci, w_out*Cout+co] = w9[kh, w_in-w_out+1, ci, co] for
    |w_in-w_out| <= 1, else 0.  Absent bands reproduce the 'zeros' padding on
    the left/right image columns.
    """
    # shifts[kw, a, b] = 1  iff  a == b + kw - 1
    shifts = jnp.stack([jnp.eye(width, k=1 - kw, dtype=jnp.float32) for kw in range(3)])
    wb = jnp.einsum('kab,hkio->haibo', shifts, w9)    # (3, W, Cin, W, Cout)
    cin, cout = w9.shape[2], w9.shape[3]
    return wb.reshape(3, width * cin, width * cout)


def _bn_fold_flat(stats, count, gamma, beta, width, eps=1e-5):
    """Fold batch statistics (training mode, biased variance) into a flat affine."""
    c = gamma.shape[0]
    tot = jnp.sum(stats, axis=(0, 1))                 # (2, W*C)
    tot = tot.reshape(2, width, c).sum(axis=1)        # (2, C)
    mean = tot[0] / count
    # E[x^2] - E[x]^2 in f32; fine at these scales (see review note on cancellation).
    var = tot[1] / count - mean * mean
    scale = gamma * jax.lax.rsqrt(var + eps)
    shift = beta - mean * scale
    # Broadcast the per-channel affine across W for the flat (W*C) lane layout.
    return (jnp.tile(scale, width).reshape(1, width * c),
            jnp.tile(shift, width).reshape(1, width * c))


def double_conv_forward(x_nchw, params, tile_rows=None):
    """(Conv3x3 => BN => ReLU) * 2; input/output in PyTorch NCHW layout."""
    N, Cin, H, W = x_nchw.shape
    Cmid, Cout = params["w1"].shape[-1], params["w2"].shape[-1]
    assert H % 8 == 0, "TODO(synk): ragged H (not a multiple of 8) needs masked edge tiles"

    # NCHW -> flat lane-dense NHWC (single XLA pass; disappears in an NHWC model).
    x = jnp.transpose(x_nchw, (0, 2, 3, 1)).reshape(N, H, W * Cin).astype(jnp.float32)

    # Banded im2col-free weights, bf16 for the MXU (kept VMEM-resident per conv).
    wb1 = _banded_weights(params["w1"].reshape(3, 3, Cin, Cmid), W).astype(jnp.bfloat16)
    wb2 = _banded_weights(params["w2"].reshape(3, 3, Cmid, Cout), W).astype(jnp.bfloat16)
    assert wb1.size * 2 <= 8 << 20 and wb2.size * 2 <= 8 << 20, (
        "banded weights too large for VMEM residency; see TODO(synk) on large W*C")

    # Tile sizing from the full per-step working set vs. the actual chip VMEM.
    cap = _tpu_vmem_capacity()
    budget = min(cap, 128 * 1024 * 1024) // 16          # per-step working-set target
    def rows_bytes(ci, co, in_b, out_b):                 # input blk + f32/bf16 temps + acc + out blk
        return W * (ci * (in_b + 4 + 2) + co * (4 + out_b))
    bpr = max(rows_bytes(Cin, Cmid, 4, 2), rows_bytes(Cmid, Cout, 2, 2))
    tile_h = tile_rows if tile_rows is not None else _pick_tile_rows(H, bpr, budget)
    assert H % tile_h == 0 and tile_h % 8 == 0, "tile_rows must be a multiple of 8 dividing H"
    vmem_limit = int(min(cap // 2, 64 * 1024 * 1024))

    count = float(N * H * W)
    ones_in = jnp.ones((1, W * Cin), jnp.float32)
    zeros_in = jnp.zeros((1, W * Cin), jnp.float32)

    # Block 1: conv1 (raw bf16 output) + BN1 partial sums (f32).
    y1, st1 = _conv_block(x, wb1, ones_in, zeros_in, fuse_pre=False,
                          tile_h=tile_h, vmem_limit=vmem_limit)
    scale1, shift1 = _bn_fold_flat(st1, count, params["g1"], params["b1"], W)

    # Block 2: BN1+ReLU fused into conv2's input path; conv2 (raw) + BN2 partials.
    y2, st2 = _conv_block(y1, wb2, scale1, shift1, fuse_pre=True,
                          tile_h=tile_h, vmem_limit=vmem_limit)
    scale2, shift2 = _bn_fold_flat(st2, count, params["g2"], params["b2"], W)

    # Final BN2 + ReLU (tiled elementwise kernel, lane-dense f32 output).
    out_flat = _affine_relu(y2, scale2, shift2, tile_h=tile_h, vmem_limit=vmem_limit)

    # flat NHWC -> NCHW at the PyTorch boundary (single XLA pass).
    return jnp.transpose(out_flat.reshape(N, H, W, Cout), (0, 3, 1, 2))


# ---------------------------------------------------------------------------
# Parameters and reference
# ---------------------------------------------------------------------------

def init_params(key, in_channels, mid_channels, out_channels):
    """Deterministic synthetic parameters (shapes match the PyTorch module)."""
    k1, k2 = jax.random.split(key)
    # Conv weights stored as (kh*3+kw, Cin, Cout); equivalent to torch (Cout, Cin, 3, 3).
    w1 = jax.random.normal(k1, (9, in_channels, mid_channels), jnp.float32) * 0.1
    w2 = jax.random.normal(k2, (9, mid_channels, out_channels), jnp.float32) * 0.1
    return {
        "w1": w1,
        "g1": jnp.ones((mid_channels,), jnp.float32),   # BN gamma init
        "b1": jnp.zeros((mid_channels,), jnp.float32),  # BN beta init
        "w2": w2,
        "g2": jnp.ones((out_channels,), jnp.float32),
        "b2": jnp.zeros((out_channels,), jnp.float32),
    }


def _reference_forward(x_nchw, params, eps=1e-5):
    """Pure-JAX (XLA) f32 reference of the same forward, for self-checking."""
    def block(x_nhwc, w9, gamma, beta):
        cin, cout = w9.shape[1], w9.shape[2]
        w_hwio = w9.reshape(3, 3, cin, cout)
        y = jax.lax.conv_general_dilated(
            x_nhwc, w_hwio, window_strides=(1, 1), padding="SAME",
            dimension_numbers=("NHWC", "HWIO", "NHWC"))
        mean = jnp.mean(y, axis=(0, 1, 2))
        var = jnp.mean((y - mean) ** 2, axis=(0, 1, 2))
        y = (y - mean) * jax.lax.rsqrt(var + eps) * gamma + beta
        return jnp.maximum(y, 0.0)

    x = jnp.transpose(x_nchw, (0, 2, 3, 1))
    y = block(x, params["w1"], params["g1"], params["b1"])
    y = block(y, params["w2"], params["g2"], params["b2"])
    return jnp.transpose(y, (0, 3, 1, 2))


if __name__ == "__main__":
    key = jax.random.PRNGKey(0)
    kx, kp = jax.random.split(key)

    N, Cin, Cmid, Cout, H, W = 2, 4, 8, 8, 16, 16
    x = jax.random.normal(kx, (N, Cin, H, W), jnp.float32)   # NCHW, like PyTorch
    params = init_params(kp, Cin, Cmid, Cout)

    fwd = jax.jit(double_conv_forward, static_argnames=("tile_rows",))
    out = fwd(x, params, tile_rows=8)   # 2 row-tiles per image -> exercises the halo path
    jax.block_until_ready(out)

    assert out.shape == (N, Cout, H, W), out.shape
    assert bool(jnp.all(out >= 0.0))    # final ReLU

    # Self-check vs an f32 XLA reference (loose tolerance: bf16 MXU inputs + bf16 intermediates).
    ref = jax.jit(_reference_forward)(x, params)
    max_err = float(jnp.max(jnp.abs(out - ref)))
    assert max_err < 1e-1, f"max abs error vs reference: {max_err}"

    print("KERNEL_OK")
</pallas_src>

<mosaic_0001>
module attributes {stable_mosaic.version = 11 : i64} {
  func.func @_conv3x3_kernel(%arg0: i32, %arg1: i32, %arg2: memref<1x8x64xf32, #tpu.memory_space<vmem>>, %arg3: memref<1x8x64xf32, #tpu.memory_space<vmem>>, %arg4: memref<1x8x64xf32, #tpu.memory_space<vmem>>, %arg5: memref<3x64x128xbf16, #tpu.memory_space<vmem>>, %arg6: memref<1x64xf32, #tpu.memory_space<vmem>>, %arg7: memref<1x64xf32, #tpu.memory_space<vmem>>, %arg8: memref<1x8x128xbf16, #tpu.memory_space<vmem>>, %arg9: memref<1x1x2x128xf32, #tpu.memory_space<vmem>>) attributes {dimension_semantics = [#tpu.dimension_semantics<parallel>, #tpu.dimension_semantics<parallel>], iteration_bounds = array<i64: 2, 2>, scalar_prefetch = 0 : i64, scratch_operands = 0 : i64, tpu.core_type = #tpu.core_type<tc>, window_params = [{transform_indices = @transform_0, window_bounds = array<i64: 1, 8, 64>}, {transform_indices = @transform_1, window_bounds = array<i64: 1, 8, 64>}, {transform_indices = @transform_2, window_bounds = array<i64: 1, 8, 64>}, {pipeline_mode = #tpu.pipeline_mode<synchronous>, transform_indices = @transform_3, window_bounds = array<i64: 3, 64, 128>}, {pipeline_mode = #tpu.pipeline_mode<synchronous>, transform_indices = @transform_4, window_bounds = array<i64: 1, 64>}, {pipeline_mode = #tpu.pipeline_mode<synchronous>, transform_indices = @transform_5, window_bounds = array<i64: 1, 64>}, {transform_indices = @transform_6, window_bounds = array<i64: 1, 8, 128>}, {transform_indices = @transform_7, window_bounds = array<i64: 1, 1, 2, 128>}]} {
    %c0 = arith.constant 0 : index
    %c0_0 = arith.constant 0 : index
    %c0_1 = arith.constant 0 : index
    %0 = vector.load %arg2[%c0, %c0_0, %c0_1] : memref<1x8x64xf32, #tpu.memory_space<vmem>>, vector<1x8x64xf32>
    %1 = vector.shape_cast %0 : vector<1x8x64xf32> to vector<8x64xf32>
    %c0_2 = arith.constant 0 : index
    %c7 = arith.constant 7 : index
    %c0_3 = arith.constant 0 : index
    %2 = vector.load %arg3[%c0_2, %c7, %c0_3] : memref<1x8x64xf32, #tpu.memory_space<vmem>>, vector<1x1x64xf32>
    %3 = vector.shape_cast %2 : vector<1x1x64xf32> to vector<1x64xf32>
    %c0_4 = arith.constant 0 : index
    %c0_5 = arith.constant 0 : index
    %c0_6 = arith.constant 0 : index
    %4 = vector.load %arg4[%c0_4, %c0_5, %c0_6] : memref<1x8x64xf32, #tpu.memory_space<vmem>>, vector<1x1x64xf32>
    %5 = vector.shape_cast %4 : vector<1x1x64xf32> to vector<1x64xf32>
    %c0_i32 = arith.constant 0 : i32
    %6 = arith.cmpi sgt, %arg1, %c0_i32 : i32
    %cst = arith.constant 0.000000e+00 : f32
    %7 = vector.broadcast %cst : f32 to vector<1x64xf32>
    %8 = arith.select %6, %3, %7 : vector<1x64xf32>
    %c1_i32 = arith.constant 1 : i32
    %9 = arith.cmpi slt, %arg1, %c1_i32 : i32
    %cst_7 = arith.constant 0.000000e+00 : f32
    %10 = vector.broadcast %cst_7 : f32 to vector<1x64xf32>
    %11 = arith.select %9, %5, %10 : vector<1x64xf32>
    %12 = tpu.concatenate %8, %1, %11 in 0 : vector<1x64xf32>, vector<8x64xf32>, vector<1x64xf32> -> vector<10x64xf32>
    %13 = arith.truncf %12 : vector<10x64xf32> to vector<10x64xbf16>
    %cst_8 = arith.constant 0.000000e+00 : f32
    %14 = vector.broadcast %cst_8 : f32 to vector<8x128xf32>
    %15 = vector.extract_strided_slice %13 {offsets = [0, 0], sizes = [8, 64], strides = [1, 1]} : vector<10x64xbf16> to vector<8x64xbf16>
    %c0_9 = arith.constant 0 : index
    %c0_10 = arith.constant 0 : index
    %c0_11 = arith.constant 0 : index
    %16 = vector.load %arg5[%c0_9, %c0_10, %c0_11] : memref<3x64x128xbf16, #tpu.memory_space<vmem>>, vector<1x64x128xbf16>
    %17 = vector.shape_cast %16 : vector<1x64x128xbf16> to vector<64x128xbf16>
    %cst_12 = arith.constant dense<0.000000e+00> : vector<8x128xf32>
    %18 = tpu.matmul %15, %17, %cst_12 {dimension_numbers = #tpu.dot_dimension_numbers<[1], [0], [0], [1], [0, 0, 1, 1], [], []>} : vector<8x64xbf16>, vector<64x128xbf16>, vector<8x128xf32> -> vector<8x128xf32>
    %19 = arith.addf %14, %18 : vector<8x128xf32>
    %20 = vector.extract_strided_slice %13 {offsets = [1, 0], sizes = [8, 64], strides = [1, 1]} : vector<10x64xbf16> to vector<8x64xbf16>
    %c1 = arith.constant 1 : index
    %c0_13 = arith.constant 0 : index
    %c0_14 = arith.constant 0 : index
    %21 = vector.load %arg5[%c1, %c0_13, %c0_14] : memref<3x64x128xbf16, #tpu.memory_space<vmem>>, vector<1x64x128xbf16>
    %22 = vector.shape_cast %21 : vector<1x64x128xbf16> to vector<64x128xbf16>
    %cst_15 = arith.constant dense<0.000000e+00> : vector<8x128xf32>
    %23 = tpu.matmul %20, %22, %cst_15 {dimension_numbers = #tpu.dot_dimension_numbers<[1], [0], [0], [1], [0, 0, 1, 1], [], []>} : vector<8x64xbf16>, vector<64x128xbf16>, vector<8x128xf32> -> vector<8x128xf32>
    %24 = arith.addf %19, %23 : vector<8x128xf32>
    %25 = vector.extract_strided_slice %13 {offsets = [2, 0], sizes = [8, 64], strides = [1, 1]} : vector<10x64xbf16> to vector<8x64xbf16>
    %c2 = arith.constant 2 : index
    %c0_16 = arith.constant 0 : index
    %c0_17 = arith.constant 0 : index
    %26 = vector.load %arg5[%c2, %c0_16, %c0_17] : memref<3x64x128xbf16, #tpu.memory_space<vmem>>, vector<1x64x128xbf16>
    %27 = vector.shape_cast %26 : vector<1x64x128xbf16> to vector<64x128xbf16>
    %cst_18 = arith.constant dense<0.000000e+00> : vector<8x128xf32>
    %28 = tpu.matmul %25, %27, %cst_18 {dimension_numbers = #tpu.dot_dimension_numbers<[1], [0], [0], [1], [0, 0, 1, 1], [], []>} : vector<8x64xbf16>, vector<64x128xbf16>, vector<8x128xf32> -> vector<8x128xf32>
    %29 = arith.addf %24, %28 : vector<8x128xf32>
    %30 = arith.truncf %29 : vector<8x128xf32> to vector<8x128xbf16>
    %c0_19 = arith.constant 0 : index
    %c0_20 = arith.constant 0 : index
    %c0_21 = arith.constant 0 : index
    %31 = vector.load %arg8[%c0_19, %c0_20, %c0_21] : memref<1x8x128xbf16, #tpu.memory_space<vmem>>, vector<1x8x128xbf16>
    %32 = vector.shape_cast %31 : vector<1x8x128xbf16> to vector<8x128xbf16>
    %33 = vector.shape_cast %30 : vector<8x128xbf16> to vector<1x8x128xbf16>
    tpu.vector_store %arg8[%c0_19, %c0_20, %c0_21], %33 {strides = array<i32>} : memref<1x8x128xbf16, #tpu.memory_space<vmem>>, vector<1x8x128xbf16>,
    %cst_22 = arith.constant dense<0.000000e+00> : vector<128xf32>
    %34 = vector.multi_reduction <add>, %29, %cst_22 [0] : vector<8x128xf32> to vector<128xf32>
    %35 = vector.shape_cast %34 : vector<128xf32> to vector<1x128xf32>
    %36 = arith.mulf %29, %29 : vector<8x128xf32>
    %cst_23 = arith.constant dense<0.000000e+00> : vector<128xf32>
    %37 = vector.multi_reduction <add>, %36, %cst_23 [0] : vector<8x128xf32> to vector<128xf32>
    %38 = vector.shape_cast %37 : vector<128xf32> to vector<1x128xf32>
    %39 = tpu.concatenate %35, %38 in 0 : vector<1x128xf32>, vector<1x128xf32> -> vector<2x128xf32>
    %c0_24 = arith.constant 0 : index
    %c0_25 = arith.constant 0 : index
    %c0_26 = arith.constant 0 : index
    %c0_27 = arith.constant 0 : index
    %40 = vector.load %arg9[%c0_24, %c0_25, %c0_26, %c0_27] : memref<1x1x2x128xf32, #tpu.memory_space<vmem>>, vector<1x1x2x128xf32>
    %41 = vector.shape_cast %40 : vector<1x1x2x128xf32> to vector<2x128xf32>
    %42 = vector.shape_cast %39 : vector<2x128xf32> to vector<1x1x2x128xf32>
    tpu.vector_store %arg9[%c0_24, %c0_25, %c0_26, %c0_27], %42 {strides = array<i32>} : memref<1x1x2x128xf32, #tpu.memory_space<vmem>>, vector<1x1x2x128xf32>,
    return
  }
  func.func @transform_0(%arg0: i32, %arg1: i32) -> (i32, i32, i32) {
    %c0_i32 = arith.constant 0 : i32
    %c0_i32_0 = arith.constant 0 : i32
    return %arg0, %arg1, %c0_i32 : i32, i32, i32
  }
  func.func @transform_1(%arg0: i32, %arg1: i32) -> (i32, i32, i32) {
    %c1_i32 = arith.constant 1 : i32
    %0 = arith.muli %arg1, %c1_i32 : i32
    %c1_i32_0 = arith.constant 1 : i32
    %1 = arith.subi %0, %c1_i32_0 : i32
    %c0_i32 = arith.constant 0 : i32
    %2 = arith.maxsi %1, %c0_i32 : i32
    %c0_i32_1 = arith.constant 0 : i32
    %c0_i32_2 = arith.constant 0 : i32
    return %arg0, %2, %c0_i32_1 : i32, i32, i32
  }
  func.func @transform_2(%arg0: i32, %arg1: i32) -> (i32, i32, i32) {
    %c1_i32 = arith.constant 1 : i32
    %0 = arith.addi %arg1, %c1_i32 : i32
    %c1_i32_0 = arith.constant 1 : i32
    %1 = arith.muli %0, %c1_i32_0 : i32
    %c1_i32_1 = arith.constant 1 : i32
    %2 = arith.minsi %1, %c1_i32_1 : i32
    %c0_i32 = arith.constant 0 : i32
    %c0_i32_2 = arith.constant 0 : i32
    return %arg0, %2, %c0_i32 : i32, i32, i32
  }
  func.func @transform_3(%arg0: i32, %arg1: i32) -> (i32, i32, i32) {
    %c0_i32 = arith.constant 0 : i32
    %c0_i32_0 = arith.constant 0 : i32
    %c0_i32_1 = arith.constant 0 : i32
    %c0_i32_2 = arith.constant 0 : i32
    return %c0_i32, %c0_i32_0, %c0_i32_1 : i32, i32, i32
  }
  func.func @transform_4(%arg0: i32, %arg1: i32) -> (i32, i32) {
    %c0_i32 = arith.constant 0 : i32
    %c0_i32_0 = arith.constant 0 : i32
    %c0_i32_1 = arith.constant 0 : i32
    return %c0_i32, %c0_i32_0 : i32, i32
  }
  func.func @transform_5(%arg0: i32, %arg1: i32) -> (i32, i32) {
    %c0_i32 = arith.constant 0 : i32
    %c0_i32_0 = arith.constant 0 : i32
    %c0_i32_1 = arith.constant 0 : i32
    return %c0_i32, %c0_i32_0 : i32, i32
  }
  func.func @transform_6(%arg0: i32, %arg1: i32) -> (i32, i32, i32) {
    %c0_i32 = arith.constant 0 : i32
    %c0_i32_0 = arith.constant 0 : i32
    return %arg0, %arg1, %c0_i32 : i32, i32, i32
  }
  func.func @transform_7(%arg0: i32, %arg1: i32) -> (i32, i32, i32, i32) {
    %c0_i32 = arith.constant 0 : i32
    %c0_i32_0 = arith.constant 0 : i32
    %c0_i32_1 = arith.constant 0 : i32
    return %arg0, %arg1, %c0_i32, %c0_i32_0 : i32, i32, i32, i32
  }
}

module attributes {stable_mosaic.version = 11 : i64} {
  func.func @_conv3x3_kernel(%arg0: i32, %arg1: i32, %arg2: memref<1x8x128xbf16, #tpu.memory_space<vmem>>, %arg3: memref<1x8x128xbf16, #tpu.memory_space<vmem>>, %arg4: memref<1x8x128xbf16, #tpu.memory_space<vmem>>, %arg5: memref<3x128x128xbf16, #tpu.memory_space<vmem>>, %arg6: memref<1x128xf32, #tpu.memory_space<vmem>>, %arg7: memref<1x128xf32, #tpu.memory_space<vmem>>, %arg8: memref<1x8x128xbf16, #tpu.memory_space<vmem>>, %arg9: memref<1x1x2x128xf32, #tpu.memory_space<vmem>>) attributes {dimension_semantics = [#tpu.dimension_semantics<parallel>, #tpu.dimension_semantics<parallel>], iteration_bounds = array<i64: 2, 2>, scalar_prefetch = 0 : i64, scratch_operands = 0 : i64, tpu.core_type = #tpu.core_type<tc>, window_params = [{transform_indices = @transform_0, window_bounds = array<i64: 1, 8, 128>}, {transform_indices = @transform_1, window_bounds = array<i64: 1, 8, 128>}, {transform_indices = @transform_2, window_bounds = array<i64: 1, 8, 128>}, {pipeline_mode = #tpu.pipeline_mode<synchronous>, transform_indices = @transform_3, window_bounds = array<i64: 3, 128, 128>}, {pipeline_mode = #tpu.pipeline_mode<synchronous>, transform_indices = @transform_4, window_bounds = array<i64: 1, 128>}, {pipeline_mode = #tpu.pipeline_mode<synchronous>, transform_indices = @transform_5, window_bounds = array<i64: 1, 128>}, {transform_indices = @transform_6, window_bounds = array<i64: 1, 8, 128>}, {transform_indices = @transform_7, window_bounds = array<i64: 1, 1, 2, 128>}]} {
    %c0 = arith.constant 0 : index
    %c0_0 = arith.constant 0 : index
    %c0_1 = arith.constant 0 : index
    %0 = vector.load %arg2[%c0, %c0_0, %c0_1] : memref<1x8x128xbf16, #tpu.memory_space<vmem>>, vector<1x8x128xbf16>
    %1 = vector.shape_cast %0 : vector<1x8x128xbf16> to vector<8x128xbf16>
    %2 = arith.extf %1 : vector<8x128xbf16> to vector<8x128xf32>
    %c0_2 = arith.constant 0 : index
    %c7 = arith.constant 7 : index
    %c0_3 = arith.constant 0 : index
    %3 = vector.load %arg3[%c0_2, %c7, %c0_3] : memref<1x8x128xbf16, #tpu.memory_space<vmem>>, vector<1x1x128xbf16>
    %4 = vector.shape_cast %3 : vector<1x1x128xbf16> to vector<1x128xbf16>
    %5 = arith.extf %4 : vector<1x128xbf16> to vector<1x128xf32>
    %c0_4 = arith.constant 0 : index
    %c0_5 = arith.constant 0 : index
    %c0_6 = arith.constant 0 : index
    %6 = vector.load %arg4[%c0_4, %c0_5, %c0_6] : memref<1x8x128xbf16, #tpu.memory_space<vmem>>, vector<1x1x128xbf16>
    %7 = vector.shape_cast %6 : vector<1x1x128xbf16> to vector<1x128xbf16>
    %8 = arith.extf %7 : vector<1x128xbf16> to vector<1x128xf32>
    %c0_7 = arith.constant 0 : index
    %c0_8 = arith.constant 0 : index
    %9 = vector.load %arg6[%c0_7, %c0_8] : memref<1x128xf32, #tpu.memory_space<vmem>>, vector<1x128xf32>
    %c0_9 = arith.constant 0 : index
    %c0_10 = arith.constant 0 : index
    %10 = vector.load %arg7[%c0_9, %c0_10] : memref<1x128xf32, #tpu.memory_space<vmem>>, vector<1x128xf32>
    %11 = vector.broadcast %9 : vector<1x128xf32> to vector<8x128xf32>
    %12 = arith.mulf %2, %11 : vector<8x128xf32>
    %13 = vector.broadcast %10 : vector<1x128xf32> to vector<8x128xf32>
    %14 = arith.addf %12, %13 : vector<8x128xf32>
    %cst = arith.constant 0.000000e+00 : f32
    %15 = vector.broadcast %cst : f32 to vector<8x128xf32>
    %16 = arith.maximumf %14, %15 : vector<8x128xf32>
    %17 = arith.mulf %5, %9 : vector<1x128xf32>
    %18 = arith.addf %17, %10 : vector<1x128xf32>
    %cst_11 = arith.constant 0.000000e+00 : f32
    %19 = vector.broadcast %cst_11 : f32 to vector<1x128xf32>
    %20 = arith.maximumf %18, %19 : vector<1x128xf32>
    %21 = arith.mulf %8, %9 : vector<1x128xf32>
    %22 = arith.addf %21, %10 : vector<1x128xf32>
    %cst_12 = arith.constant 0.000000e+00 : f32
    %23 = vector.broadcast %cst_12 : f32 to vector<1x128xf32>
    %24 = arith.maximumf %22, %23 : vector<1x128xf32>
    %c0_i32 = arith.constant 0 : i32
    %25 = arith.cmpi sgt, %arg1, %c0_i32 : i32
    %cst_13 = arith.constant 0.000000e+00 : f32
    %26 = vector.broadcast %cst_13 : f32 to vector<1x128xf32>
    %27 = arith.select %25, %20, %26 : vector<1x128xf32>
    %c1_i32 = arith.constant 1 : i32
    %28 = arith.cmpi slt, %arg1, %c1_i32 : i32
    %cst_14 = arith.constant 0.000000e+00 : f32
    %29 = vector.broadcast %cst_14 : f32 to vector<1x128xf32>
    %30 = arith.select %28, %24, %29 : vector<1x128xf32>
    %31 = tpu.concatenate %27, %16, %30 in 0 : vector<1x128xf32>, vector<8x128xf32>, vector<1x128xf32> -> vector<10x128xf32>
    %32 = arith.truncf %31 : vector<10x128xf32> to vector<10x128xbf16>
    %cst_15 = arith.constant 0.000000e+00 : f32
    %33 = vector.broadcast %cst_15 : f32 to vector<8x128xf32>
    %34 = vector.extract_strided_slice %32 {offsets = [0, 0], sizes = [8, 128], strides = [1, 1]} : vector<10x128xbf16> to vector<8x128xbf16>
    %c0_16 = arith.constant 0 : index
    %c0_17 = arith.constant 0 : index
    %c0_18 = arith.constant 0 : index
    %35 = vector.load %arg5[%c0_16, %c0_17, %c0_18] : memref<3x128x128xbf16, #tpu.memory_space<vmem>>, vector<1x128x128xbf16>
    %36 = vector.shape_cast %35 : vector<1x128x128xbf16> to vector<128x128xbf16>
    %cst_19 = arith.constant dense<0.000000e+00> : vector<8x128xf32>
    %37 = tpu.matmul %34, %36, %cst_19 {dimension_numbers = #tpu.dot_dimension_numbers<[1], [0], [0], [1], [0, 0, 1, 1], [], []>} : vector<8x128xbf16>, vector<128x128xbf16>, vector<8x128xf32> -> vector<8x128xf32>
    %38 = arith.addf %33, %37 : vector<8x128xf32>
    %39 = vector.extract_strided_slice %32 {offsets = [1, 0], sizes = [8, 128], strides = [1, 1]} : vector<10x128xbf16> to vector<8x128xbf16>
    %c1 = arith.constant 1 : index
    %c0_20 = arith.constant 0 : index
    %c0_21 = arith.constant 0 : index
    %40 = vector.load %arg5[%c1, %c0_20, %c0_21] : memref<3x128x128xbf16, #tpu.memory_space<vmem>>, vector<1x128x128xbf16>
    %41 = vector.shape_cast %40 : vector<1x128x128xbf16> to vector<128x128xbf16>
    %cst_22 = arith.constant dense<0.000000e+00> : vector<8x128xf32>
    %42 = tpu.matmul %39, %41, %cst_22 {dimension_numbers = #tpu.dot_dimension_numbers<[1], [0], [0], [1], [0, 0, 1, 1], [], []>} : vector<8x128xbf16>, vector<128x128xbf16>, vector<8x128xf32> -> vector<8x128xf32>
    %43 = arith.addf %38, %42 : vector<8x128xf32>
    %44 = vector.extract_strided_slice %32 {offsets = [2, 0], sizes = [8, 128], strides = [1, 1]} : vector<10x128xbf16> to vector<8x128xbf16>
    %c2 = arith.constant 2 : index
    %c0_23 = arith.constant 0 : index
    %c0_24 = arith.constant 0 : index
    %45 = vector.load %arg5[%c2, %c0_23, %c0_24] : memref<3x128x128xbf16, #tpu.memory_space<vmem>>, vector<1x128x128xbf16>
    %46 = vector.shape_cast %45 : vector<1x128x128xbf16> to vector<128x128xbf16>
    %cst_25 = arith.constant dense<0.000000e+00> : vector<8x128xf32>
    %47 = tpu.matmul %44, %46, %cst_25 {dimension_numbers = #tpu.dot_dimension_numbers<[1], [0], [0], [1], [0, 0, 1, 1], [], []>} : vector<8x128xbf16>, vector<128x128xbf16>, vector<8x128xf32> -> vector<8x128xf32>
    %48 = arith.addf %43, %47 : vector<8x128xf32>
    %49 = arith.truncf %48 : vector<8x128xf32> to vector<8x128xbf16>
    %c0_26 = arith.constant 0 : index
    %c0_27 = arith.constant 0 : index
    %c0_28 = arith.constant 0 : index
    %50 = vector.load %arg8[%c0_26, %c0_27, %c0_28] : memref<1x8x128xbf16, #tpu.memory_space<vmem>>, vector<1x8x128xbf16>
    %51 = vector.shape_cast %50 : vector<1x8x128xbf16> to vector<8x128xbf16>
    %52 = vector.shape_cast %49 : vector<8x128xbf16> to vector<1x8x128xbf16>
    tpu.vector_store %arg8[%c0_26, %c0_27, %c0_28], %52 {strides = array<i32>} : memref<1x8x128xbf16, #tpu.memory_space<vmem>>, vector<1x8x128xbf16>,
    %cst_29 = arith.constant dense<0.000000e+00> : vector<128xf32>
    %53 = vector.multi_reduction <add>, %48, %cst_29 [0] : vector<8x128xf32> to vector<128xf32>
    %54 = vector.shape_cast %53 : vector<128xf32> to vector<1x128xf32>
    %55 = arith.mulf %48, %48 : vector<8x128xf32>
    %cst_30 = arith.constant dense<0.000000e+00> : vector<128xf32>
    %56 = vector.multi_reduction <add>, %55, %cst_30 [0] : vector<8x128xf32> to vector<128xf32>
    %57 = vector.shape_cast %56 : vector<128xf32> to vector<1x128xf32>
    %58 = tpu.concatenate %54, %57 in 0 : vector<1x128xf32>, vector<1x128xf32> -> vector<2x128xf32>
    %c0_31 = arith.constant 0 : index
    %c0_32 = arith.constant 0 : index
    %c0_33 = arith.constant 0 : index
    %c0_34 = arith.constant 0 : index
    %59 = vector.load %arg9[%c0_31, %c0_32, %c0_33, %c0_34] : memref<1x1x2x128xf32, #tpu.memory_space<vmem>>, vector<1x1x2x128xf32>
    %60 = vector.shape_cast %59 : vector<1x1x2x128xf32> to vector<2x128xf32>
    %61 = vector.shape_cast %58 : vector<2x128xf32> to vector<1x1x2x128xf32>
    tpu.vector_store %arg9[%c0_31, %c0_32, %c0_33, %c0_34], %61 {strides = array<i32>} : memref<1x1x2x128xf32, #tpu.memory_space<vmem>>, vector<1x1x2x128xf32>,
    return
  }
  func.func @transform_0(%arg0: i32, %arg1: i32) -> (i32, i32, i32) {
    %c0_i32 = arith.constant 0 : i32
    %c0_i32_0 = arith.constant 0 : i32
    return %arg0, %arg1, %c0_i32 : i32, i32, i32
  }
  func.func @transform_1(%arg0: i32, %arg1: i32) -> (i32, i32, i32) {
    %c1_i32 = arith.constant 1 : i32
    %0 = arith.muli %arg1, %c1_i32 : i32
    %c1_i32_0 = arith.constant 1 : i32
    %1 = arith.subi %0, %c1_i32_0 : i32
    %c0_i32 = arith.constant 0 : i32
    %2 = arith.maxsi %1, %c0_i32 : i32
    %c0_i32_1 = arith.constant 0 : i32
    %c0_i32_2 = arith.constant 0 : i32
    return %arg0, %2, %c0_i32_1 : i32, i32, i32
  }
  func.func @transform_2(%arg0: i32, %arg1: i32) -> (i32, i32, i32) {
    %c1_i32 = arith.constant 1 : i32
    %0 = arith.addi %arg1, %c1_i32 : i32
    %c1_i32_0 = arith.constant 1 : i32
    %1 = arith.muli %0, %c1_i32_0 : i32
    %c1_i32_1 = arith.constant 1 : i32
    %2 = arith.minsi %1, %c1_i32_1 : i32
    %c0_i32 = arith.constant 0 : i32
    %c0_i32_2 = arith.constant 0 : i32
    return %arg0, %2, %c0_i32 : i32, i32, i32
  }
  func.func @transform_3(%arg0: i32, %arg1: i32) -> (i32, i32, i32) {
    %c0_i32 = arith.constant 0 : i32
    %c0_i32_0 = arith.constant 0 : i32
    %c0_i32_1 = arith.constant 0 : i32
    %c0_i32_2 = arith.constant 0 : i32
    return %c0_i32, %c0_i32_0, %c0_i32_1 : i32, i32, i32
  }
  func.func @transform_4(%arg0: i32, %arg1: i32) -> (i32, i32) {
    %c0_i32 = arith.constant 0 : i32
    %c0_i32_0 = arith.constant 0 : i32
    %c0_i32_1 = arith.constant 0 : i32
    return %c0_i32, %c0_i32_0 : i32, i32
  }
  func.func @transform_5(%arg0: i32, %arg1: i32) -> (i32, i32) {
    %c0_i32 = arith.constant 0 : i32
    %c0_i32_0 = arith.constant 0 : i32
    %c0_i32_1 = arith.constant 0 : i32
    return %c0_i32, %c0_i32_0 : i32, i32
  }
  func.func @transform_6(%arg0: i32, %arg1: i32) -> (i32, i32, i32) {
    %c0_i32 = arith.constant 0 : i32
    %c0_i32_0 = arith.constant 0 : i32
    return %arg0, %arg1, %c0_i32 : i32, i32, i32
  }
  func.func @transform_7(%arg0: i32, %arg1: i32) -> (i32, i32, i32, i32) {
    %c0_i32 = arith.constant 0 : i32
    %c0_i32_0 = arith.constant 0 : i32
    %c0_i32_1 = arith.constant 0 : i32
    return %arg0, %arg1, %c0_i32, %c0_i32_0 : i32, i32, i32, i32
  }
}

module attributes {stable_mosaic.version = 11 : i64} {
  func.func @_affine_relu_kernel(%arg0: i32, %arg1: i32, %arg2: memref<1x8x128xbf16, #tpu.memory_space<vmem>>, %arg3: memref<1x128xf32, #tpu.memory_space<vmem>>, %arg4: memref<1x128xf32, #tpu.memory_space<vmem>>, %arg5: memref<1x8x128xf32, #tpu.memory_space<vmem>>) attributes {dimension_semantics = [#tpu.dimension_semantics<parallel>, #tpu.dimension_semantics<parallel>], iteration_bounds = array<i64: 2, 2>, scalar_prefetch = 0 : i64, scratch_operands = 0 : i64, tpu.core_type = #tpu.core_type<tc>, window_params = [{transform_indices = @transform_0, window_bounds = array<i64: 1, 8, 128>}, {pipeline_mode = #tpu.pipeline_mode<synchronous>, transform_indices = @transform_1, window_bounds = array<i64: 1, 128>}, {pipeline_mode = #tpu.pipeline_mode<synchronous>, transform_indices = @transform_2, window_bounds = array<i64: 1, 128>}, {transform_indices = @transform_3, window_bounds = array<i64: 1, 8, 128>}]} {
    %c0 = arith.constant 0 : index
    %c0_0 = arith.constant 0 : index
    %c0_1 = arith.constant 0 : index
    %0 = vector.load %arg2[%c0, %c0_0, %c0_1] : memref<1x8x128xbf16, #tpu.memory_space<vmem>>, vector<1x8x128xbf16>
    %1 = vector.shape_cast %0 : vector<1x8x128xbf16> to vector<8x128xbf16>
    %2 = arith.extf %1 : vector<8x128xbf16> to vector<8x128xf32>
    %c0_2 = arith.constant 0 : index
    %c0_3 = arith.constant 0 : index
    %3 = vector.load %arg3[%c0_2, %c0_3] : memref<1x128xf32, #tpu.memory_space<vmem>>, vector<1x128xf32>
    %4 = vector.broadcast %3 : vector<1x128xf32> to vector<8x128xf32>
    %5 = arith.mulf %2, %4 : vector<8x128xf32>
    %c0_4 = arith.constant 0 : index
    %c0_5 = arith.constant 0 : index
    %6 = vector.load %arg4[%c0_4, %c0_5] : memref<1x128xf32, #tpu.memory_space<vmem>>, vector<1x128xf32>
    %7 = vector.broadcast %6 : vector<1x128xf32> to vector<8x128xf32>
    %8 = arith.addf %5, %7 : vector<8x128xf32>
    %cst = arith.constant 0.000000e+00 : f32
    %9 = vector.broadcast %cst : f32 to vector<8x128xf32>
    %10 = arith.maximumf %8, %9 : vector<8x128xf32>
    %c0_6 = arith.constant 0 : index
    %c0_7 = arith.constant 0 : index
    %c0_8 = arith.constant 0 : index
    %11 = vector.load %arg5[%c0_6, %c0_7, %c0_8] : memref<1x8x128xf32, #tpu.memory_space<vmem>>, vector<1x8x128xf32>
    %12 = vector.shape_cast %11 : vector<1x8x128xf32> to vector<8x128xf32>
    %13 = vector.shape_cast %10 : vector<8x128xf32> to vector<1x8x128xf32>
    tpu.vector_store %arg5[%c0_6, %c0_7, %c0_8], %13 {strides = array<i32>} : memref<1x8x128xf32, #tpu.memory_space<vmem>>, vector<1x8x128xf32>,
    return
  }
  func.func @transform_0(%arg0: i32, %arg1: i32) -> (i32, i32, i32) {
    %c0_i32 = arith.constant 0 : i32
    %c0_i32_0 = arith.constant 0 : i32
    return %arg0, %arg1, %c0_i32 : i32, i32, i32
  }
  func.func @transform_1(%arg0: i32, %arg1: i32) -> (i32, i32) {
    %c0_i32 = arith.constant 0 : i32
    %c0_i32_0 = arith.constant 0 : i32
    %c0_i32_1 = arith.constant 0 : i32
    return %c0_i32, %c0_i32_0 : i32, i32
  }
  func.func @transform_2(%arg0: i32, %arg1: i32) -> (i32, i32) {
    %c0_i32 = arith.constant 0 : i32
    %c0_i32_0 = arith.constant 0 : i32
    %c0_i32_1 = arith.constant 0 : i32
    return %c0_i32, %c0_i32_0 : i32, i32
  }
  func.func @transform_3(%arg0: i32, %arg1: i32) -> (i32, i32, i32) {
    %c0_i32 = arith.constant 0 : i32
    %c0_i32_0 = arith.constant 0 : i32
    return %arg0, %arg1, %c0_i32 : i32, i32, i32
  }
}

</mosaic_0001>

<llo_original>
// kernel: tile.28
$region0: #{tile.28}
  #allocation0 [shape = 's32[1]{0}', space=sflag, size = 0x4, scoped, tag = 'scoped memory for tile.28']
  %s0 = inlined_call_operand.vmem [shape: f32[8], index: 0, kind: input, shape index: {}]
  %s1 = inlined_call_operand.vmem [shape: f32[16,8], index: 1, kind: output, shape index: {}]
  // Predicated region
  $region2: #{tile.28} parent=0 // pred_check
    _
  $region3: #{tile.28} parent=0 // pred_check_branch
    %3 = sbr.rel (0) target = $region5
  $region4: #{tile.28} parent=0 // pred_region
    _
  $region5: #{tile.28} parent=0 // pred_fallthru
    _
  %v4 = vld [vmem:[%s0] ss:$0 sm:$0xff]
  %5 = vst [vmem:[%s1] sm:$0xff] %v4
  %s6 = scalar_lea.vmem %s1, 8
  %7 = vst [vmem:[%s6] sm:$0xff] %v4

// kernel: tile.29
$region0: #{tile.29}
  %s0 = inlined_call_operand.vmem [shape: f32[16,8], index: 0, kind: input, shape index: {}]
  %s1 = inlined_call_operand.vmem [shape: f32[1,128], index: 1, kind: output, shape index: {}]
  $region1: #{tile.29} parent=0
    #allocation0 [shape = 'u8[4096]{0}', space=vmem, size = 0x1000, scoped, tag = 'scoped mem for output reshape']
    %v2 = vld [vmem:[%s0] sm:$0x1]
    %vm3 = vcmask 64512
    %4 = vst.msk [vmem:[#allocation0] sm:$0x1] %vm3, %v2
    %s5 = scalar_lea.vmem %s0, 15
    %v6 = vld [vmem:[%s5] sm:$0x1]
    %7 = vrot.lane.b32.xlu0 %v6, 120
    %v8 = vpop.permute.xlu0 %7
    %vm9 = vcmask 1048512
    %10 = vst.msk [vmem:[#allocation0] sm:$0x1] %vm9, %v8
    %s11 = scalar_lea.vmem %s0, 14
    %v12 = vld [vmem:[%s11] sm:$0x1]
    %13 = vrot.lane.b32.xlu0 %v12, 112
    %v14 = vpop.permute.xlu0 %13
    %vm15 = vcmask 982912
    %16 = vst.msk [vmem:[#allocation0] sm:$0x1] %vm15, %v14
    %s17 = scalar_lea.vmem %s0, 13
    %v18 = vld [vmem:[%s17] sm:$0x1]
    %19 = vrot.lane.b32.xlu0 %v18, 104
    %v20 = vpop.permute.xlu0 %19
    %vm21 = vcmask 917312
    %22 = vst.msk [vmem:[#allocation0] sm:$0x1] %vm21, %v20
    %s23 = scalar_lea.vmem %s0, 12
    %v24 = vld [vmem:[%s23] sm:$0x1]
    %25 = vrot.lane.b32.xlu0 %v24, 96
    %v26 = vpop.permute.xlu0 %25
    %vm27 = vcmask 851712
    %28 = vst.msk [vmem:[#allocation0] sm:$0x1] %vm27, %v26
    %s29 = scalar_lea.vmem %s0, 11
    %v30 = vld [vmem:[%s29] sm:$0x1]
    %31 = vrot.lane.b32.xlu0 %v30, 88
    %v32 = vpop.permute.xlu0 %31
    %vm33 = vcmask 786112
    %34 = vst.msk [vmem:[#allocation0] sm:$0x1] %vm33, %v32
    %s35 = scalar_lea.vmem %s0, 10
    %v36 = vld [vmem:[%s35] sm:$0x1]
    %37 = vrot.lane.b32.xlu0 %v36, 80
    %v38 = vpop.permute.xlu0 %37
    %vm39 = vcmask 720512
    %40 = vst.msk [vmem:[#allocation0] sm:$0x1] %vm39, %v38
    %s41 = scalar_lea.vmem %s0, 9
    %v42 = vld [vmem:[%s41] sm:$0x1]
    %43 = vrot.lane.b32.xlu0 %v42, 72
    %v44 = vpop.permute.xlu0 %43
    %vm45 = vcmask 654912
    %46 = vst.msk [vmem:[#allocation0] sm:$0x1] %vm45, %v44
    %s47 = scalar_lea.vmem %s0, 8
    %v48 = vld [vmem:[%s47] sm:$0x1]
    %49 = vrot.lane.b32.xlu0 %v48, 64
    %v50 = vpop.permute.xlu0 %49
    %vm51 = vcmask 589312
    %52 = vst.msk [vmem:[#allocation0] sm:$0x1] %vm51, %v50
    %s53 = scalar_lea.vmem %s0, 7
    %v54 = vld [vmem:[%s53] sm:$0x1]
    %55 = vrot.lane.b32.xlu0 %v54, 56
    %v56 = vpop.permute.xlu0 %55
    %vm57 = vcmask 523712
    %58 = vst.msk [vmem:[#allocation0] sm:$0x1] %vm57, %v56
    %s59 = scalar_lea.vmem %s0, 6
    %v60 = vld [vmem:[%s59] sm:$0x1]
    %61 = vrot.lane.b32.xlu0 %v60, 48
    %v62 = vpop.permute.xlu0 %61
    %vm63 = vcmask 458112
    %64 = vst.msk [vmem:[#allocation0] sm:$0x1] %vm63, %v62
    %s65 = scalar_lea.vmem %s0, 5
    %v66 = vld [vmem:[%s65] sm:$0x1]
    %67 = vrot.lane.b32.xlu0 %v66, 40
    %v68 = vpop.permute.xlu0 %67
    %vm69 = vcmask 392512
    %70 = vst.msk [vmem:[#allocation0] sm:$0x1] %vm69, %v68
    %s71 = scalar_lea.vmem %s0, 4
    %v72 = vld [vmem:[%s71] sm:$0x1]
    %73 = vrot.lane.b32.xlu0 %v72, 32
    %v74 = vpop.permute.xlu0 %73
    %vm75 = vcmask 326912
    %76 = vst.msk [vmem:[#allocation0] sm:$0x1] %vm75, %v74
    %s77 = scalar_lea.vmem %s0, 3
    %v78 = vld [vmem:[%s77] sm:$0x1]
    %79 = vrot.lane.b32.xlu0 %v78, 24
    %v80 = vpop.permute.xlu0 %79
    %vm81 = vcmask 261312
    %82 = vst.msk [vmem:[#allocation0] sm:$0x1] %vm81, %v80
    %s83 = scalar_lea.vmem %s0, 2
    %v84 = vld [vmem:[%s83] sm:$0x1]
    %85 = vrot.lane.b32.xlu0 %v84, 16
    %v86 = vpop.permute.xlu0 %85
    %vm87 = vcmask 195712
    %88 = vst.msk [vmem:[#allocation0] sm:$0x1] %vm87, %v86
    %s89 = scalar_lea.vmem %s0, 1
    %v90 = vld [vmem:[%s89] sm:$0x1]
    %91 = vrot.lane.b32.xlu0 %v90, 8
    %v92 = vpop.permute.xlu0 %91
    %vm93 = vcmask 130112
    %94 = vst.msk [vmem:[#allocation0] sm:$0x1] %vm93, %v92
    %s96 = sshllo.u32 0, 1
    %v98 = vld [vmem:[#allocation0] sm:%s96]
    %s99 = sshllo.u32 0, 1
    %100 = vst [vmem:[%s1] sm:%s99] %v98

// kernel: double_conv_forward.3
$region0: #{double_conv_forward.3}
  #allocation0 [shape = 'u32[]', space=smem, size = 0x4, offset = 0x4, fixed_abs, tag = 'smem constant byte address 0x4 - core index']
  #allocation1 [shape = 'u32[144,128]{1,0:T(1,128)}', space=vmem, size = 0x12000, scoped, tag = 'internal scratch']
  %s0 = inlined_call_operand.vmem [shape: f32[2,16,64], index: 0, kind: input, shape index: {}, may-alias: {0,1,2}]
  %s1 = inlined_call_operand.vmem [shape: f32[2,16,64], index: 1, kind: input, shape index: {}, may-alias: {0,1,2}]
  %s2 = inlined_call_operand.vmem [shape: f32[2,16,64], index: 2, kind: input, shape index: {}, may-alias: {0,1,2}]
  %s3 = inlined_call_operand.vmem [shape: bf16[3,64,128], index: 3, kind: input, shape index: {}]
  %s4 = inlined_call_operand.vmem [shape: f32[1,64], index: 4, kind: input, shape index: {}]
  %s5 = inlined_call_operand.vmem [shape: f32[1,64], index: 5, kind: input, shape index: {}]
  %s6 = inlined_call_operand.vmem [shape: bf16[2,16,128], index: 6, kind: output, shape index: {0}]
  %s7 = inlined_call_operand.vmem [shape: f32[2,2,2,128], index: 7, kind: output, shape index: {1}]
  %8 = xla_tuple %s6, %s7
  %s9 = sld [smem:[#allocation0]]
  $region65: #{double_conv_forward.3} parent=0
    _
  %s11 = ssub.s32 1, %s9
  %s12 = scalar_select 0, %s11, %s9
  loop: start=0, step=1, limit=6
  $region2: #{double_conv_forward.3} parent=0 // loop_pre_header
    _
  $region3: #{double_conv_forward.3} parent=0 // loop_header
    %s14 = sphi 0, %s18
    %p15 = scmp.ge.s32.totalorder %s14, 6
    %s21 = sphi 0, %s33
    %s22 = sphi 0, %s29
    %s23 = sphi 0, %s21
    %s24 = sphi 0, %s22
    %s25 = sphi 0, %s23
    %s26 = sphi 0, %s24
    %s38 = sphi 0, %s40
    %s41 = sphi 0, %s38
    %s42 = sphi 0, %s41
    %s58 = sphi 0, %s42
    %s72 = sphi 0, %s74
    %s75 = sphi 0, %s72
    %s76 = sphi 0, %s75
    %s92 = sphi 0, %s76
    %s106 = sphi 0, %s108
    %s109 = sphi 0, %s106
    %s110 = sphi 0, %s109
    %s126 = sphi 0, %s110
    %s130 = sphi 0, %s130
    %s132 = sphi 0, %s130
    %s133 = sphi 0, %s132
    %s147 = sphi 0, %s133
    %s151 = sphi 0, %s151
    %s153 = sphi 0, %s151
    %s154 = sphi 0, %s153
    %s168 = sphi 0, %s154
    %s172 = sphi 0, %s172
    %s174 = sphi 0, %s172
    %s175 = sphi 0, %s174
    %s189 = sphi 0, %s175
    %s197 = sphi 0, %s199
    %s200 = sphi 0, %s197
    %s201 = sphi 0, %s200
    %s217 = sphi 0, %s201
    %s225 = sphi 0, %s227
    %s228 = sphi 0, %s225
    %s229 = sphi 0, %s228
    %s245 = sphi 0, %s229
  $region4: #{double_conv_forward.3} parent=0 // loop_header_branch
    %17 = sbr.rel (%p15) target = $region8
  $region5: #{double_conv_forward.3} parent=0 // loop_body
    %s19 = ssub.s32 %s14, 1
    %s20 = ssub.s32 %s14, 2
    %s27 = sadd.s32 1, %s22
    %p28 = scmp.ge.s32.totalorder %s27, 2
    %s29 = scalar_select %p28, 0, %s27
    %s30 = sadd.s32 1, %s21
    %s31 = scalar_select %p28, %s30, %s21
    %p32 = scmp.ge.s32.totalorder %s31, 2
    %s33 = scalar_select %p32, 0, %s31
    %s34 = ssub.s32 %s21, %s33
    %s35 = ssub.s32 %s22, %s29
    %s36 = sor.u32 %s34, %s35
    %p37 = scmp.eq.s32.totalorder %s36, 0
    %s39 = sadd.s32 %s38, 1
    %s40 = scalar_select %p37, %s38, %s39
    %p43 = pneg %p37
    %p44 = scmp.eq.s32.totalorder %s14, 3
    %p45 = por %p43, %p44
    %p46 = scmp.ne.s32.totalorder %s38, %s41
    %p47 = scmp.eq.s32.totalorder %s14, 0
    %p48 = por %p46, %p47
    %p49 = scmp.ne.s32.totalorder %s38, %s41
    %p50 = scmp.eq.s32.totalorder %s19, 3
    %p51 = por %p49, %p50
    %p52 = scmp.ne.s32.totalorder %s41, %s42
    %p53 = scmp.eq.s32.totalorder %s19, 0
    %p54 = por %p52, %p53
    %p55 = scmp.ne.s32.totalorder %s41, %s42
    %p56 = scmp.eq.s32.totalorder %s20, 3
    %p57 = por %p55, %p56
    %p59 = scmp.ne.s32.totalorder %s42, %s58
    %p60 = scmp.eq.s32.totalorder %s20, 0
    %p61 = por %p59, %p60
    %s62 = ssub.s32 %s22, 1
    %p63 = scmp.gt.s32.totalorder %s62, 0
    %s64 = scalar_select %p63, %s62, 0
    %s65 = ssub.s32 %s29, 1
    %p66 = scmp.gt.s32.totalorder %s65, 0
    %s67 = scalar_select %p66, %s65, 0
    %s68 = ssub.s32 %s21, %s33
    %s69 = ssub.s32 %s64, %s67
    %s70 = sor.u32 %s68, %s69
    %p71 = scmp.eq.s32.totalorder %s70, 0
    %s73 = sadd.s32 %s72, 1
    %s74 = scalar_select %p71, %s72, %s73
    %p77 = pneg %p71
    %p78 = scmp.eq.s32.totalorder %s14, 3
    %p79 = por %p77, %p78
    %p80 = scmp.ne.s32.totalorder %s72, %s75
    %p81 = scmp.eq.s32.totalorder %s14, 0
    %p82 = por %p80, %p81
    %p83 = scmp.ne.s32.totalorder %s72, %s75
    %p84 = scmp.eq.s32.totalorder %s19, 3
    %p85 = por %p83, %p84
    %p86 = scmp.ne.s32.totalorder %s75, %s76
    %p87 = scmp.eq.s32.totalorder %s19, 0
    %p88 = por %p86, %p87
    %p89 = scmp.ne.s32.totalorder %s75, %s76
    %p90 = scmp.eq.s32.totalorder %s20, 3
    %p91 = por %p89, %p90
    %p93 = scmp.ne.s32.totalorder %s76, %s92
    %p94 = scmp.eq.s32.totalorder %s20, 0
    %p95 = por %p93, %p94
    %s96 = sadd.s32 %s22, 1
    %p97 = scmp.lt.s32.totalorder %s96, 1
    %s98 = scalar_select %p97, %s96, 1
    %s99 = sadd.s32 %s29, 1
    %p100 = scmp.lt.s32.totalorder %s99, 1
    %s101 = scalar_select %p100, %s99, 1
    %s102 = ssub.s32 %s21, %s33
    %s103 = ssub.s32 %s98, %s101
    %s104 = sor.u32 %s102, %s103
    %p105 = scmp.eq.s32.totalorder %s104, 0
    %s107 = sadd.s32 %s106, 1
    %s108 = scalar_select %p105, %s106, %s107
    %p111 = pneg %p105
    %p112 = scmp.eq.s32.totalorder %s14, 3
    %p113 = por %p111, %p112
    %p114 = scmp.ne.s32.totalorder %s106, %s109
    %p115 = scmp.eq.s32.totalorder %s14, 0
    %p116 = por %p114, %p115
    %p117 = scmp.ne.s32.totalorder %s106, %s109
    %p118 = scmp.eq.s32.totalorder %s19, 3
    %p119 = por %p117, %p118
    %p120 = scmp.ne.s32.totalorder %s109, %s110
    %p121 = scmp.eq.s32.totalorder %s19, 0
    %p122 = por %p120, %p121
    %p123 = scmp.ne.s32.totalorder %s109, %s110
    %p124 = scmp.eq.s32.totalorder %s20, 3
    %p125 = por %p123, %p124
    %p127 = scmp.ne.s32.totalorder %s110, %s126
    %p128 = scmp.eq.s32.totalorder %s20, 0
    %p129 = por %p127, %p128
    %s131 = sadd.s32 %s130, 1
    %p134 = scmp.eq.s32.totalorder %s14, 3
    %p135 = scmp.ne.s32.totalorder %s130, %s132
    %p136 = scmp.eq.s32.totalorder %s14, 0
    %p137 = por %p135, %p136
    %p138 = scmp.ne.s32.totalorder %s130, %s132
    %p139 = scmp.eq.s32.totalorder %s19, 3
    %p140 = por %p138, %p139
    %p141 = scmp.ne.s32.totalorder %s132, %s133
    %p142 = scmp.eq.s32.totalorder %s19, 0
    %p143 = por %p141, %p142
    %p144 = scmp.ne.s32.totalorder %s132, %s133
    %p145 = scmp.eq.s32.totalorder %s20, 3
    %p146 = por %p144, %p145
    %p148 = scmp.ne.s32.totalorder %s133, %s147
    %p149 = scmp.eq.s32.totalorder %s20, 0
    %p150 = por %p148, %p149
    %s152 = sadd.s32 %s151, 1
    %p155 = scmp.eq.s32.totalorder %s14, 3
    %p156 = scmp.ne.s32.totalorder %s151, %s153
    %p157 = scmp.eq.s32.totalorder %s14, 0
    %p158 = por %p156, %p157
    %p159 = scmp.ne.s32.totalorder %s151, %s153
    %p160 = scmp.eq.s32.totalorder %s19, 3
    %p161 = por %p159, %p160
    %p162 = scmp.ne.s32.totalorder %s153, %s154
    %p163 = scmp.eq.s32.totalorder %s19, 0
    %p164 = por %p162, %p163
    %p165 = scmp.ne.s32.totalorder %s153, %s154
    %p166 = scmp.eq.s32.totalorder %s20, 3
    %p167 = por %p165, %p166
    %p169 = scmp.ne.s32.totalorder %s154, %s168
    %p170 = scmp.eq.s32.totalorder %s20, 0
    %p171 = por %p169, %p170
    %s173 = sadd.s32 %s172, 1
    %p176 = scmp.eq.s32.totalorder %s14, 3
    %p177 = scmp.ne.s32.totalorder %s172, %s174
    %p178 = scmp.eq.s32.totalorder %s14, 0
    %p179 = por %p177, %p178
    %p180 = scmp.ne.s32.totalorder %s172, %s174
    %p181 = scmp.eq.s32.totalorder %s19, 3
    %p182 = por %p180, %p181
    %p183 = scmp.ne.s32.totalorder %s174, %s175
    %p184 = scmp.eq.s32.totalorder %s19, 0
    %p185 = por %p183, %p184
    %p186 = scmp.ne.s32.totalorder %s174, %s175
    %p187 = scmp.eq.s32.totalorder %s20, 3
    %p188 = por %p186, %p187
    %p190 = scmp.ne.s32.totalorder %s175, %s189
    %p191 = scmp.eq.s32.totalorder %s20, 0
    %p192 = por %p190, %p191
    %s193 = ssub.s32 %s21, %s33
    %s194 = ssub.s32 %s22, %s29
    %s195 = sor.u32 %s193, %s194
    %p196 = scmp.eq.s32.totalorder %s195, 0
    %s198 = sadd.s32 %s197, 1
    %s199 = scalar_select %p196, %s197, %s198
    %p202 = pneg %p196
    %p203 = scmp.eq.s32.totalorder %s14, 3
    %p204 = por %p202, %p203
    %p205 = scmp.ne.s32.totalorder %s197, %s200
    %p206 = scmp.eq.s32.totalorder %s14, 0
    %p207 = por %p205, %p206
    %p208 = scmp.ne.s32.totalorder %s197, %s200
    %p209 = scmp.eq.s32.totalorder %s19, 3
    %p210 = por %p208, %p209
    %p211 = scmp.ne.s32.totalorder %s200, %s201
    %p212 = scmp.eq.s32.totalorder %s19, 0
    %p213 = por %p211, %p212
    %p214 = scmp.ne.s32.totalorder %s200, %s201
    %p215 = scmp.eq.s32.totalorder %s20, 3
    %p216 = por %p214, %p215
    %p218 = scmp.ne.s32.totalorder %s201, %s217
    %p219 = scmp.eq.s32.totalorder %s20, 0
    %p220 = por %p218, %p219
    %s221 = ssub.s32 %s21, %s33
    %s222 = ssub.s32 %s22, %s29
    %s223 = sor.u32 %s221, %s222
    %p224 = scmp.eq.s32.totalorder %s223, 0
    %s226 = sadd.s32 %s225, 1
    %s227 = scalar_select %p224, %s225, %s226
    %p230 = pneg %p224
    %p231 = scmp.eq.s32.totalorder %s14, 3
    %p232 = por %p230, %p231
    %p233 = scmp.ne.s32.totalorder %s225, %s228
    %p234 = scmp.eq.s32.totalorder %s14, 0
    %p235 = por %p233, %p234
    %p236 = scmp.ne.s32.totalorder %s225, %s228
    %p237 = scmp.eq.s32.totalorder %s19, 3
    %p238 = por %p236, %p237
    %p239 = scmp.ne.s32.totalorder %s228, %s229
    %p240 = scmp.eq.s32.totalorder %s19, 0
    %p241 = por %p239, %p240
    %p242 = scmp.ne.s32.totalorder %s228, %s229
    %p243 = scmp.eq.s32.totalorder %s20, 3
    %p244 = por %p242, %p243
    %p246 = scmp.ne.s32.totalorder %s229, %s245
    %p247 = scmp.eq.s32.totalorder %s20, 0
    %p248 = por %p246, %p247
    %p249 = scmp.le.s32.totalorder 1, %s14
    %p250 = scmp.lt.s32.totalorder %s14, 5
    %p251 = pnand %p249, %p250
    %p252 = pneg %p251
    // Predicated region
    $region9: #{double_conv_forward.3} parent=5 // pred_check
      _
    $region10: #{double_conv_forward.3} parent=5 // pred_check_branch
      %254 = sbr.rel (%p251) target = $region12
    $region11: #{double_conv_forward.3} parent=5 // pred_region
      %s255 = ssub.s32 %s14, 1
      // Predicated region
      $region13: #{double_conv_forward.3} parent=11 // pred_check
        %p256 = pneg %p143
      $region14: #{double_conv_forward.3} parent=11 // pred_check_branch
        %258 = sbr.rel (%p256) target = $region16
      $region15: #{double_conv_forward.3} parent=11 // pred_region
        _
      $region16: #{double_conv_forward.3} parent=11 // pred_fallthru
        _
      // Predicated region
      $region17: #{double_conv_forward.3} parent=11 // pred_check
        %p259 = pneg %p164
      $region18: #{double_conv_forward.3} parent=11 // pred_check_branch
        %261 = sbr.rel (%p259) target = $region20
      $region19: #{double_conv_forward.3} parent=11 // pred_region
        _
      $region20: #{double_conv_forward.3} parent=11 // pred_fallthru
        _
      // Predicated region
      $region21: #{double_conv_forward.3} parent=11 // pred_check
        %p262 = pneg %p185
      $region22: #{double_conv_forward.3} parent=11 // pred_check_branch
        %264 = sbr.rel (%p262) target = $region24
      $region23: #{double_conv_forward.3} parent=11 // pred_region
        _
      $region24: #{double_conv_forward.3} parent=11 // pred_fallthru
        _
    $region12: #{double_conv_forward.3} parent=5 // pred_fallthru
      _
    %p265 = scmp.lt.s32.totalorder %s14, 4
    // Predicated region
    $region25: #{double_conv_forward.3} parent=5 // pred_check
      %p266 = pneg %p265
    $region26: #{double_conv_forward.3} parent=5 // pred_check_branch
      %268 = sbr.rel (%p266) target = $region28
    $region27: #{double_conv_forward.3} parent=5 // pred_region
      // Predicated region
      $region29: #{double_conv_forward.3} parent=27 // pred_check
        %p269 = pneg %p48
      $region30: #{double_conv_forward.3} parent=27 // pred_check_branch
        %271 = sbr.rel (%p269) target = $region32
      $region31: #{double_conv_forward.3} parent=27 // pred_region
        %p272 = scmp.lt.s32.totalorder %s21, 1
        %s273 = scalar_select %p272, %s21, 1
        %p274 = scmp.lt.s32.totalorder %s22, 1
        %s275 = scalar_select %p274, %s22, 1
        %s276 = smul.addr %s273, 2
        %s277 = sadd.s32 %s275, %s276
        %s278 = smul.addr %s277, 8
        %s279 = scalar_lea.vmem %s0, %s278
      $region32: #{double_conv_forward.3} parent=27 // pred_fallthru
        _
      // Predicated region
      $region33: #{double_conv_forward.3} parent=27 // pred_check
        %p280 = pneg %p82
      $region34: #{double_conv_forward.3} parent=27 // pred_check_branch
        %282 = sbr.rel (%p280) target = $region36
      $region35: #{double_conv_forward.3} parent=27 // pred_region
        %s283 = ssub.s32 %s22, 1
        %p284 = scmp.gt.s32.totalorder %s283, 0
        %s285 = scalar_select %p284, %s283, 0
        %p286 = scmp.lt.s32.totalorder %s21, 1
        %s287 = scalar_select %p286, %s21, 1
        %p288 = scmp.lt.s32.totalorder %s285, 1
        %s289 = scalar_select %p288, %s285, 1
        %s290 = smul.addr %s287, 2
        %s291 = sadd.s32 %s289, %s290
        %s292 = smul.addr %s291, 8
        %s293 = scalar_lea.vmem %s1, %s292
        %s294 = ssub.s32 %s22, 1
        %p295 = scmp.gt.s32.totalorder %s294, 0
        %s296 = scalar_select %p295, %s294, 0
      $region36: #{double_conv_forward.3} parent=27 // pred_fallthru
        _
      // Predicated region
      $region37: #{double_conv_forward.3} parent=27 // pred_check
        %p297 = pneg %p116
      $region38: #{double_conv_forward.3} parent=27 // pred_check_branch
        %299 = sbr.rel (%p297) target = $region40
      $region39: #{double_conv_forward.3} parent=27 // pred_region
        %s300 = sadd.s32 %s22, 1
        %p301 = scmp.lt.s32.totalorder %s300, 1
        %s302 = scalar_select %p301, %s300, 1
        %p303 = scmp.lt.s32.totalorder %s21, 1
        %s304 = scalar_select %p303, %s21, 1
        %p305 = scmp.lt.s32.totalorder %s302, 1
        %s306 = scalar_select %p305, %s302, 1
        %s307 = smul.addr %s304, 2
        %s308 = sadd.s32 %s306, %s307
        %s309 = smul.addr %s308, 8
        %s310 = scalar_lea.vmem %s2, %s309
        %s311 = sadd.s32 %s22, 1
        %p312 = scmp.lt.s32.totalorder %s311, 1
        %s313 = scalar_select %p312, %s311, 1
      $region40: #{double_conv_forward.3} parent=27 // pred_fallthru
        _
    $region28: #{double_conv_forward.3} parent=5 // pred_fallthru
      _
    %p314 = scmp.le.s32.totalorder 1, %s14
    %p315 = scmp.lt.s32.totalorder %s14, 5
    %p316 = pnand %p314, %p315
    %p317 = pneg %p316
    // Predicated region
    $region41: #{double_conv_forward.3} parent=5 // pred_check
      _
    $region42: #{double_conv_forward.3} parent=5 // pred_check_branch
      %319 = sbr.rel (%p316) target = $region44
    $region43: #{double_conv_forward.3} parent=5 // pred_region
      %s320 = ssub.s32 %s14, 1
      %p321 = scmp.lt.s32.totalorder %s23, 1
      %s322 = scalar_select %p321, %s23, 1
      %p323 = scmp.lt.s32.totalorder %s24, 1
      %s324 = scalar_select %p323, %s24, 1
      %s325 = smul.addr %s322, 2
      %s326 = sadd.s32 %s324, %s325
      %s327 = smul.addr %s326, 8
      %s328 = scalar_lea.vmem %s0, %s327
      %p329 = pneg %p54
      %p330 = pneg %p51
      %s331 = ssub.s32 %s24, 1
      %p332 = scmp.gt.s32.totalorder %s331, 0
      %s333 = scalar_select %p332, %s331, 0
      %p334 = scmp.lt.s32.totalorder %s23, 1
      %s335 = scalar_select %p334, %s23, 1
      %p336 = scmp.lt.s32.totalorder %s333, 1
      %s337 = scalar_select %p336, %s333, 1
      %s338 = smul.addr %s335, 2
      %s339 = sadd.s32 %s337, %s338
      %s340 = smul.addr %s339, 8
      %s341 = scalar_lea.vmem %s1, %s340
      %p342 = pneg %p88
      %p343 = pneg %p85
      %s344 = sadd.s32 %s24, 1
      %p345 = scmp.lt.s32.totalorder %s344, 1
      %s346 = scalar_select %p345, %s344, 1
      %p347 = scmp.lt.s32.totalorder %s23, 1
      %s348 = scalar_select %p347, %s23, 1
      %p349 = scmp.lt.s32.totalorder %s346, 1
      %s350 = scalar_select %p349, %s346, 1
      %s351 = smul.addr %s348, 2
      %s352 = sadd.s32 %s350, %s351
      %s353 = smul.addr %s352, 8
      %s354 = scalar_lea.vmem %s2, %s353
      %p355 = pneg %p122
      %p356 = pneg %p119
      %p357 = pneg %p143
      %p358 = pneg %p140
      %p359 = pneg %p164
      %p360 = pneg %p161
      %p361 = pneg %p185
      %p362 = pneg %p182
      %p363 = pneg %p213
      %p364 = pneg %p210
      %p365 = scmp.lt.s32.totalorder %s23, 1
      %s366 = scalar_select %p365, %s23, 1
      %p367 = scmp.lt.s32.totalorder %s24, 1
      %s368 = scalar_select %p367, %s24, 1
      %s369 = smul.addr %s366, 2
      %s370 = sadd.s32 %s368, %s369
      %s371 = smul.addr %s370, 4
      %s372 = scalar_lea.vmem %s6, %s371
      %p373 = pneg %p241
      %p374 = pneg %p238
      %p375 = scmp.lt.s32.totalorder %s23, 1
      %s376 = scalar_select %p375, %s23, 1
      %p377 = scmp.lt.s32.totalorder %s24, 1
      %s378 = scalar_select %p377, %s24, 1
      %s379 = smul.addr %s376, 2
      %s380 = sadd.s32 %s378, %s379
      %s381 = smul.addr %s380, 2
      %s382 = scalar_lea.vmem %s7, %s381
      %p383 = scmp.lt.s32.totalorder %s23, 1
      %s384 = scalar_select %p383, %s23, 1
      %p385 = scmp.lt.s32.totalorder %s24, 1
      %s386 = scalar_select %p385, %s24, 1
      %s387 = smul.addr %s384, 2
      %s388 = sadd.s32 %s386, %s387
      %s389 = smul.addr %s388, 8
      %s390 = scalar_lea.vmem %s0, %s389
      %s391 = ssub.s32 %s24, 1
      %p392 = scmp.gt.s32.totalorder %s391, 0
      %s393 = scalar_select %p392, %s391, 0
      %p394 = scmp.lt.s32.totalorder %s23, 1
      %s395 = scalar_select %p394, %s23, 1
      %p396 = scmp.lt.s32.totalorder %s393, 1
      %s397 = scalar_select %p396, %s393, 1
      %s398 = smul.addr %s395, 2
      %s399 = sadd.s32 %s397, %s398
      %s400 = smul.addr %s399, 8
      %s401 = scalar_lea.vmem %s1, %s400
      %s402 = ssub.s32 %s24, 1
      %p403 = scmp.gt.s32.totalorder %s402, 0
      %s404 = scalar_select %p403, %s402, 0
      %s405 = sadd.s32 %s24, 1
      %p406 = scmp.lt.s32.totalorder %s405, 1
      %s407 = scalar_select %p406, %s405, 1
      %p408 = scmp.lt.s32.totalorder %s23, 1
      %s409 = scalar_select %p408, %s23, 1
      %p410 = scmp.lt.s32.totalorder %s407, 1
      %s411 = scalar_select %p410, %s407, 1
      %s412 = smul.addr %s409, 2
      %s413 = sadd.s32 %s411, %s412
      %s414 = smul.addr %s413, 8
      %s415 = scalar_lea.vmem %s2, %s414
      %s416 = sadd.s32 %s24, 1
      %p417 = scmp.lt.s32.totalorder %s416, 1
      %s418 = scalar_select %p417, %s416, 1
      %p419 = scmp.lt.s32.totalorder %s23, 1
      %s420 = scalar_select %p419, %s23, 1
      %p421 = scmp.lt.s32.totalorder %s24, 1
      %s422 = scalar_select %p421, %s24, 1
      %s423 = smul.addr %s420, 2
      %s424 = sadd.s32 %s422, %s423
      %s425 = smul.addr %s424, 4
      %s426 = scalar_lea.vmem %s6, %s425
      %p427 = scmp.lt.s32.totalorder %s23, 1
      %s428 = scalar_select %p427, %s23, 1
      %p429 = scmp.lt.s32.totalorder %s24, 1
      %s430 = scalar_select %p429, %s24, 1
      %s431 = smul.addr %s428, 2
      %s432 = sadd.s32 %s430, %s431
      %s433 = smul.addr %s432, 2
      %s434 = scalar_lea.vmem %s7, %s433
      %v436 = vld [vmem:[%s390] sm:$0xff]
      %v437 = vld [vmem:[%s401 + $0x7] sm:$0x1]
      %v438 = vld [vmem:[%s415] sm:$0x1]
      %p439 = scmp.gt.s32.totalorder %s24, 0
      %s440 = scalar_select %p439, 1, 0
      %v441 = vstv %s440
      %vm442 = vcmp.eq.s32.totalorder %v441, 1
      %v443 = vsel %vm442, %v437, 0.0
      %p444 = scmp.lt.s32.totalorder %s24, 1
      %s445 = scalar_select %p444, 1, 0
      %v446 = vstv %s445
      %vm447 = vcmp.eq.s32.totalorder %v446, 1
      %v448 = vsel %vm447, %v438, 0.0
      %v450 = vrot.slane %v436, 7
      %v453 = vrot.slane %v448, 7
      %vm455 = vcmask 1040384
      %v456 = vsel %vm455, %v443, %v450
      %v457 = vsel %vm455, %v450, %v453
      %v458 = vpack.c.bf16 %v457, %v456
      %v459 = vld [vmem:[%s3] sm:$0xf]
      %v460 = vld [vmem:[%s3 + $0x4] sm:$0xf]
      %v461 = vld [vmem:[%s3 + $0x8] sm:$0xf]
      %v462 = vld [vmem:[%s3 + $0xc] sm:$0xf]
      %v463 = vld [vmem:[%s3 + $0x10] sm:$0xf]
      %v464 = vld [vmem:[%s3 + $0x14] sm:$0xf]
      %v465 = vld [vmem:[%s3 + $0x18] sm:$0xf]
      %v466 = vld [vmem:[%s3 + $0x1c] sm:$0xf]
      %s467 = scalar_lea.vmem %s3, 32
      %v468 = vld [vmem:[%s467] sm:$0xf]
      %v469 = vld [vmem:[%s467 + $0x4] sm:$0xf]
      %v470 = vld [vmem:[%s467 + $0x8] sm:$0xf]
      %v471 = vld [vmem:[%s467 + $0xc] sm:$0xf]
      %v472 = vld [vmem:[%s467 + $0x10] sm:$0xf]
      %v473 = vld [vmem:[%s467 + $0x14] sm:$0xf]
      %v474 = vld [vmem:[%s467 + $0x18] sm:$0xf]
      %v475 = vld [vmem:[%s467 + $0x1c] sm:$0xf]
      %v477 = vshrl.u32 %v458, 16
      %v479 = vshll.u32 %v458, 16
      %v481 = vrot.slane %v479, 1
      %v482 = vor.u32 %v477, %v481
      %v491 = vunpack.c.l.b16 %v468
      %v492 = vunpack.c.l.b16 %v469
      %v493 = vunpack.c.l.b16 %v470
      %v494 = vunpack.c.l.b16 %v471
      %v495 = vunpack.c.l.b16 %v472
      %v496 = vunpack.c.l.b16 %v473
      %v497 = vunpack.c.l.b16 %v474
      %v498 = vunpack.c.l.b16 %v475
      %v499 = vpack.c.b16 %v492, %v491
      %v500 = vpack.c.b16 %v494, %v493
      %v501 = vpack.c.b16 %v496, %v495
      %v502 = vpack.c.b16 %v498, %v497
      %vm507 = vcmask 523264
      %v509 = vsel %vm507, %v482, 0
      %511 = vmatprep.subr.bf16.mxu0 0
      %512 = vmatpush1.bf16.msra.mxu0 %v499
      %513 = vmatprep.subr.bf16.mxu0 0
      %514 = vmatpush1.bf16.msra.mxu0 %v500
      %515 = vmatprep.subr.bf16.mxu0 0
      %516 = vmatpush1.bf16.msra.mxu0 %v501
      %517 = vmatprep.subr.bf16.mxu0 0
      %518 = vmatpush1.bf16.msra.mxu0 %v502
      %519 = vmatprep.subr.bf16.mxu0 0
      %520 = vmatpush1.bf16.msra.mxu0 0
      %521 = vmatprep.subr.bf16.mxu0 0
      %522 = vmatpush1.bf16.msra.mxu0 0
      %523 = vmatprep.subr.bf16.mxu0 0
      %524 = vmatpush1.bf16.msra.mxu0 0
      %525 = vmatprep.subr.bf16.mxu0 0
      %526 = vmatpush1.bf16.msra.mxu0 0
      %527 = vmatprep.subr.bf16.mxu0 0
      %528 = vmatpush1.bf16.msra.mxu0 0
      %529 = vmatprep.subr.bf16.mxu0 0
      %530 = vmatpush1.bf16.msra.mxu0 0
      %531 = vmatprep.subr.bf16.mxu0 0
      %532 = vmatpush1.bf16.msra.mxu0 0
      %533 = vmatprep.subr.bf16.mxu0 0
      %534 = vmatpush1.bf16.msra.mxu0 0
      %535 = vmatprep.subr.bf16.mxu0 0
      %536 = vmatpush1.bf16.msra.mxu0 0
      %537 = vmatprep.subr.bf16.mxu0 0
      %538 = vmatpush1.bf16.msra.mxu0 0
      %539 = vmatprep.subr.bf16.mxu0 0
      %540 = vmatpush1.bf16.msra.mxu0 0
      %541 = vmatprep.subr.bf16.mxu0 0
      %542 = vmatpush1.bf16.msra.mxu0 0
      %543 = vmatprep.mubr.bf16.mxu0 0
      %544 = vmatmul.mubr.bf16.gmra.mrb[0].mxu0 %v509
      %v545 = vpop.f32.mrb[0].mxu0
      %v546 = vadd.f32 0.0, %v545
      %v547 = vpop.f32.mrb[0].mxu0
      %v548 = vpop.f32.mrb[0].mxu0
      %v549 = vpop.f32.mrb[0].mxu0
      %550 = vdwg.mxu0
      %v559 = vunpack.c.l.b16 %v459
      %v560 = vunpack.c.l.b16 %v460
      %v561 = vunpack.c.l.b16 %v461
      %v562 = vunpack.c.l.b16 %v462
      %v563 = vunpack.c.l.b16 %v463
      %v564 = vunpack.c.l.b16 %v464
      %v565 = vunpack.c.l.b16 %v465
      %v566 = vunpack.c.l.b16 %v466
      %v567 = vpack.c.b16 %v560, %v559
      %v568 = vpack.c.b16 %v562, %v561
      %v569 = vpack.c.b16 %v564, %v563
      %v570 = vpack.c.b16 %v566, %v565
      %v575 = vsel %vm507, %v458, 0
      %577 = vmatprep.subr.bf16.mxu0 0
      %578 = vmatpush1.bf16.msra.mxu0 %v567
      %579 = vmatprep.subr.bf16.mxu0 0
      %580 = vmatpush1.bf16.msra.mxu0 %v568
      %581 = vmatprep.subr.bf16.mxu0 0
      %582 = vmatpush1.bf16.msra.mxu0 %v569
      %583 = vmatprep.subr.bf16.mxu0 0
      %584 = vmatpush1.bf16.msra.mxu0 %v570
      %585 = vmatprep.subr.bf16.mxu0 0
      %586 = vmatpush1.bf16.msra.mxu0 0
      %587 = vmatprep.subr.bf16.mxu0 0
      %588 = vmatpush1.bf16.msra.mxu0 0
      %589 = vmatprep.subr.bf16.mxu0 0
      %590 = vmatpush1.bf16.msra.mxu0 0
      %591 = vmatprep.subr.bf16.mxu0 0
      %592 = vmatpush1.bf16.msra.mxu0 0
      %593 = vmatprep.subr.bf16.mxu0 0
      %594 = vmatpush1.bf16.msra.mxu0 0
      %595 = vmatprep.subr.bf16.mxu0 0
      %596 = vmatpush1.bf16.msra.mxu0 0
      %597 = vmatprep.subr.bf16.mxu0 0
      %598 = vmatpush1.bf16.msra.mxu0 0
      %599 = vmatprep.subr.bf16.mxu0 0
      %600 = vmatpush1.bf16.msra.mxu0 0
      %601 = vmatprep.subr.bf16.mxu0 0
      %602 = vmatpush1.bf16.msra.mxu0 0
      %603 = vmatprep.subr.bf16.mxu0 0
      %604 = vmatpush1.bf16.msra.mxu0 0
      %605 = vmatprep.subr.bf16.mxu0 0
      %606 = vmatpush1.bf16.msra.mxu0 0
      %607 = vmatprep.subr.bf16.mxu0 0
      %608 = vmatpush1.bf16.msra.mxu0 0
      %609 = vmatprep.mubr.bf16.mxu0 0
      %610 = vmatmul.mubr.bf16.gmra.mrb[0].mxu0 %v575
      %v611 = vpop.f32.mrb[0].mxu0
      %v612 = vadd.f32 %v546, %v611
      %v613 = vpop.f32.mrb[0].mxu0
      %v614 = vpop.f32.mrb[0].mxu0
      %v615 = vpop.f32.mrb[0].mxu0
      %616 = vdwg.mxu0
      %s617 = scalar_lea.vmem %s3, 64
      %v618 = vld [vmem:[%s617] sm:$0xf]
      %v619 = vld [vmem:[%s617 + $0x4] sm:$0xf]
      %v620 = vld [vmem:[%s617 + $0x8] sm:$0xf]
      %v621 = vld [vmem:[%s617 + $0xc] sm:$0xf]
      %v622 = vld [vmem:[%s617 + $0x10] sm:$0xf]
      %v623 = vld [vmem:[%s617 + $0x14] sm:$0xf]
      %v624 = vld [vmem:[%s617 + $0x18] sm:$0xf]
      %v625 = vld [vmem:[%s617 + $0x1c] sm:$0xf]
      %v627 = vrot.slane %v458, 1
      %v636 = vunpack.c.l.b16 %v618
      %v637 = vunpack.c.l.b16 %v619
      %v638 = vunpack.c.l.b16 %v620
      %v639 = vunpack.c.l.b16 %v621
      %v640 = vunpack.c.l.b16 %v622
      %v641 = vunpack.c.l.b16 %v623
      %v642 = vunpack.c.l.b16 %v624
      %v643 = vunpack.c.l.b16 %v625
      %v644 = vpack.c.b16 %v637, %v636
      %v645 = vpack.c.b16 %v639, %v638
      %v646 = vpack.c.b16 %v641, %v640
      %v647 = vpack.c.b16 %v643, %v642
      %v653 = vsel %vm507, %v627, 0
      %655 = vmatprep.subr.bf16.mxu0 0
      %656 = vmatpush1.bf16.msra.mxu0 %v644
      %657 = vmatprep.subr.bf16.mxu0 0
      %658 = vmatpush1.bf16.msra.mxu0 %v645
      %659 = vmatprep.subr.bf16.mxu0 0
      %660 = vmatpush1.bf16.msra.mxu0 %v646
      %661 = vmatprep.subr.bf16.mxu0 0
      %662 = vmatpush1.bf16.msra.mxu0 %v647
      %663 = vmatprep.subr.bf16.mxu0 0
      %664 = vmatpush1.bf16.msra.mxu0 0
      %665 = vmatprep.subr.bf16.mxu0 0
      %666 = vmatpush1.bf16.msra.mxu0 0
      %667 = vmatprep.subr.bf16.mxu0 0
      %668 = vmatpush1.bf16.msra.mxu0 0
      %669 = vmatprep.subr.bf16.mxu0 0
      %670 = vmatpush1.bf16.msra.mxu0 0
      %671 = vmatprep.subr.bf16.mxu0 0
      %672 = vmatpush1.bf16.msra.mxu0 0
      %673 = vmatprep.subr.bf16.mxu0 0
      %674 = vmatpush1.bf16.msra.mxu0 0
      %675 = vmatprep.subr.bf16.mxu0 0
      %676 = vmatpush1.bf16.msra.mxu0 0
      %677 = vmatprep.subr.bf16.mxu0 0
      %678 = vmatpush1.bf16.msra.mxu0 0
      %679 = vmatprep.subr.bf16.mxu0 0
      %680 = vmatpush1.bf16.msra.mxu0 0
      %681 = vmatprep.subr.bf16.mxu0 0
      %682 = vmatpush1.bf16.msra.mxu0 0
      %683 = vmatprep.subr.bf16.mxu0 0
      %684 = vmatpush1.bf16.msra.mxu0 0
      %685 = vmatprep.subr.bf16.mxu0 0
      %686 = vmatpush1.bf16.msra.mxu0 0
      %687 = vmatprep.mubr.bf16.mxu0 0
      %688 = vmatmul.mubr.bf16.gmra.mrb[0].mxu0 %v653
      %v689 = vpop.f32.mrb[0].mxu0
      %v690 = vadd.f32 0.0, %v689
      %v691 = vpop.f32.mrb[0].mxu0
      %v692 = vpop.f32.mrb[0].mxu0
      %v693 = vpop.f32.mrb[0].mxu0
      %694 = vdwg.mxu0
      %v695 = vadd.f32 %v612, %v690
      %v696 = vpack.c.bf16 %v695, %v695
      %697 = vst [vmem:[%s426] sm:$0xf] %v696
      %v698 = vrot.slane %v695, 4
      %v699 = vadd.f32 %v695, %v698
      %v700 = vrot.slane %v699, 2
      %v701 = vadd.f32 %v699, %v700
      %v702 = vrot.slane %v701, 1
      %v703 = vadd.f32 %v701, %v702
      %v704 = vmul.f32 %v695, %v695
      %v705 = vrot.slane %v704, 4
      %v706 = vadd.f32 %v704, %v705
      %v707 = vrot.slane %v706, 2
      %v708 = vadd.f32 %v706, %v707
      %v709 = vrot.slane %v708, 1
      %v710 = vadd.f32 %v708, %v709
      %v711 = vsel %vm455, %v703, %v710
      %712 = vst [vmem:[%s434] sm:$0x3] %v711
      %p713 = scmp.lt.s32.totalorder %s23, 1
      %s714 = scalar_select %p713, %s23, 1
      %p715 = scmp.lt.s32.totalorder %s24, 1
      %s716 = scalar_select %p715, %s24, 1
      %s717 = smul.addr %s714, 2
      %s718 = sadd.s32 %s716, %s717
      %s719 = smul.addr %s718, 4
      %s720 = scalar_lea.vmem %s6, %s719
      %p721 = scmp.lt.s32.totalorder %s23, 1
      %s722 = scalar_select %p721, %s23, 1
      %p723 = scmp.lt.s32.totalorder %s24, 1
      %s724 = scalar_select %p723, %s24, 1
      %s725 = smul.addr %s722, 2
      %s726 = sadd.s32 %s724, %s725
      %s727 = smul.addr %s726, 2
      %s728 = scalar_lea.vmem %s7, %s727
      // Predicated region
      $region45: #{double_conv_forward.3} parent=43 // pred_check
        %p729 = pneg %p210
      $region46: #{double_conv_forward.3} parent=43 // pred_check_branch
        %731 = sbr.rel (%p729) target = $region48
      $region47: #{double_conv_forward.3} parent=43 // pred_region
        _
      $region48: #{double_conv_forward.3} parent=43 // pred_fallthru
        _
      // Predicated region
      $region49: #{double_conv_forward.3} parent=43 // pred_check
        %p732 = pneg %p238
      $region50: #{double_conv_forward.3} parent=43 // pred_check_branch
        %734 = sbr.rel (%p732) target = $region52
      $region51: #{double_conv_forward.3} parent=43 // pred_region
        _
      $region52: #{double_conv_forward.3} parent=43 // pred_fallthru
        _
    $region44: #{double_conv_forward.3} parent=5 // pred_fallthru
      _
    %p735 = scmp.le.s32.totalorder 2, %s14
    // Predicated region
    $region53: #{double_conv_forward.3} parent=5 // pred_check
      %p736 = pneg %p735
    $region54: #{double_conv_forward.3} parent=5 // pred_check_branch
      %738 = sbr.rel (%p736) target = $region56
    $region55: #{double_conv_forward.3} parent=5 // pred_region
      %s739 = ssub.s32 %s14, 2
      // Predicated region
      $region57: #{double_conv_forward.3} parent=55 // pred_check
        %p740 = pneg %p216
      $region58: #{double_conv_forward.3} parent=55 // pred_check_branch
        %742 = sbr.rel (%p740) target = $region60
      $region59: #{double_conv_forward.3} parent=55 // pred_region
        %p743 = scmp.lt.s32.totalorder %s25, 1
        %s744 = scalar_select %p743, %s25, 1
        %p745 = scmp.lt.s32.totalorder %s26, 1
        %s746 = scalar_select %p745, %s26, 1
        %s747 = smul.addr %s744, 2
        %s748 = sadd.s32 %s746, %s747
        %s749 = smul.addr %s748, 4
        %s750 = scalar_lea.vmem %s6, %s749
      $region60: #{double_conv_forward.3} parent=55 // pred_fallthru
        _
      // Predicated region
      $region61: #{double_conv_forward.3} parent=55 // pred_check
        %p751 = pneg %p244
      $region62: #{double_conv_forward.3} parent=55 // pred_check_branch
        %753 = sbr.rel (%p751) target = $region64
      $region63: #{double_conv_forward.3} parent=55 // pred_region
        %p754 = scmp.lt.s32.totalorder %s25, 1
        %s755 = scalar_select %p754, %s25, 1
        %p756 = scmp.lt.s32.totalorder %s26, 1
        %s757 = scalar_select %p756, %s26, 1
        %s758 = smul.addr %s755, 2
        %s759 = sadd.s32 %s757, %s758
        %s760 = smul.addr %s759, 2
        %s761 = scalar_lea.vmem %s7, %s760
      $region64: #{double_conv_forward.3} parent=55 // pred_fallthru
        _
    $region56: #{double_conv_forward.3} parent=5 // pred_fallthru
      _
  $region6: #{double_conv_forward.3} parent=0 // loop_footer
    %s18 = sadd.s32 1, %s14
  $region7: #{double_conv_forward.3} parent=0 // loop_footer_branch
    %13 = sbr.rel target = $region3
  $region8: #{double_conv_forward.3} parent=0 // loop_exit
    _

// kernel: double_conv_forward.4
$region0: #{double_conv_forward.4}
  #allocation0 [shape = 'u32[]', space=smem, size = 0x4, offset = 0x4, fixed_abs, tag = 'smem constant byte address 0x4 - core index']
  #allocation1 [shape = 'u32[144,128]{1,0:T(1,128)}', space=vmem, size = 0x12000, scoped, tag = 'internal scratch']
  %s0 = inlined_call_operand.vmem [shape: bf16[2,16,128], index: 0, kind: input, shape index: {}, may-alias: {0,1,2}]
  %s1 = inlined_call_operand.vmem [shape: bf16[2,16,128], index: 1, kind: input, shape index: {}, may-alias: {0,1,2}]
  %s2 = inlined_call_operand.vmem [shape: bf16[2,16,128], index: 2, kind: input, shape index: {}, may-alias: {0,1,2}]
  %s3 = inlined_call_operand.vmem [shape: bf16[3,128,128], index: 3, kind: input, shape index: {}]
  %s4 = inlined_call_operand.vmem [shape: f32[1,128], index: 4, kind: input, shape index: {}]
  %s5 = inlined_call_operand.vmem [shape: f32[1,128], index: 5, kind: input, shape index: {}]
  %s6 = inlined_call_operand.vmem [shape: bf16[2,16,128], index: 6, kind: output, shape index: {0}]
  %s7 = inlined_call_operand.vmem [shape: f32[2,2,2,128], index: 7, kind: output, shape index: {1}]
  %8 = xla_tuple %s6, %s7
  %s9 = sld [smem:[#allocation0]]
  $region65: #{double_conv_forward.4} parent=0
    _
  %s11 = ssub.s32 1, %s9
  %s12 = scalar_select 0, %s11, %s9
  loop: start=0, step=1, limit=6
  $region2: #{double_conv_forward.4} parent=0 // loop_pre_header
    _
  $region3: #{double_conv_forward.4} parent=0 // loop_header
    %s14 = sphi 0, %s18
    %p15 = scmp.ge.s32.totalorder %s14, 6
    %s21 = sphi 0, %s33
    %s22 = sphi 0, %s29
    %s23 = sphi 0, %s21
    %s24 = sphi 0, %s22
    %s25 = sphi 0, %s23
    %s26 = sphi 0, %s24
    %s38 = sphi 0, %s40
    %s41 = sphi 0, %s38
    %s42 = sphi 0, %s41
    %s58 = sphi 0, %s42
    %s72 = sphi 0, %s74
    %s75 = sphi 0, %s72
    %s76 = sphi 0, %s75
    %s92 = sphi 0, %s76
    %s106 = sphi 0, %s108
    %s109 = sphi 0, %s106
    %s110 = sphi 0, %s109
    %s126 = sphi 0, %s110
    %s130 = sphi 0, %s130
    %s132 = sphi 0, %s130
    %s133 = sphi 0, %s132
    %s147 = sphi 0, %s133
    %s151 = sphi 0, %s151
    %s153 = sphi 0, %s151
    %s154 = sphi 0, %s153
    %s168 = sphi 0, %s154
    %s172 = sphi 0, %s172
    %s174 = sphi 0, %s172
    %s175 = sphi 0, %s174
    %s189 = sphi 0, %s175
    %s197 = sphi 0, %s199
    %s200 = sphi 0, %s197
    %s201 = sphi 0, %s200
    %s217 = sphi 0, %s201
    %s225 = sphi 0, %s227
    %s228 = sphi 0, %s225
    %s229 = sphi 0, %s228
    %s245 = sphi 0, %s229
  $region4: #{double_conv_forward.4} parent=0 // loop_header_branch
    %17 = sbr.rel (%p15) target = $region8
  $region5: #{double_conv_forward.4} parent=0 // loop_body
    %s19 = ssub.s32 %s14, 1
    %s20 = ssub.s32 %s14, 2
    %s27 = sadd.s32 1, %s22
    %p28 = scmp.ge.s32.totalorder %s27, 2
    %s29 = scalar_select %p28, 0, %s27
    %s30 = sadd.s32 1, %s21
    %s31 = scalar_select %p28, %s30, %s21
    %p32 = scmp.ge.s32.totalorder %s31, 2
    %s33 = scalar_select %p32, 0, %s31
    %s34 = ssub.s32 %s21, %s33
    %s35 = ssub.s32 %s22, %s29
    %s36 = sor.u32 %s34, %s35
    %p37 = scmp.eq.s32.totalorder %s36, 0
    %s39 = sadd.s32 %s38, 1
    %s40 = scalar_select %p37, %s38, %s39
    %p43 = pneg %p37
    %p44 = scmp.eq.s32.totalorder %s14, 3
    %p45 = por %p43, %p44
    %p46 = scmp.ne.s32.totalorder %s38, %s41
    %p47 = scmp.eq.s32.totalorder %s14, 0
    %p48 = por %p46, %p47
    %p49 = scmp.ne.s32.totalorder %s38, %s41
    %p50 = scmp.eq.s32.totalorder %s19, 3
    %p51 = por %p49, %p50
    %p52 = scmp.ne.s32.totalorder %s41, %s42
    %p53 = scmp.eq.s32.totalorder %s19, 0
    %p54 = por %p52, %p53
    %p55 = scmp.ne.s32.totalorder %s41, %s42
    %p56 = scmp.eq.s32.totalorder %s20, 3
    %p57 = por %p55, %p56
    %p59 = scmp.ne.s32.totalorder %s42, %s58
    %p60 = scmp.eq.s32.totalorder %s20, 0
    %p61 = por %p59, %p60
    %s62 = ssub.s32 %s22, 1
    %p63 = scmp.gt.s32.totalorder %s62, 0
    %s64 = scalar_select %p63, %s62, 0
    %s65 = ssub.s32 %s29, 1
    %p66 = scmp.gt.s32.totalorder %s65, 0
    %s67 = scalar_select %p66, %s65, 0
    %s68 = ssub.s32 %s21, %s33
    %s69 = ssub.s32 %s64, %s67
    %s70 = sor.u32 %s68, %s69
    %p71 = scmp.eq.s32.totalorder %s70, 0
    %s73 = sadd.s32 %s72, 1
    %s74 = scalar_select %p71, %s72, %s73
    %p77 = pneg %p71
    %p78 = scmp.eq.s32.totalorder %s14, 3
    %p79 = por %p77, %p78
    %p80 = scmp.ne.s32.totalorder %s72, %s75
    %p81 = scmp.eq.s32.totalorder %s14, 0
    %p82 = por %p80, %p81
    %p83 = scmp.ne.s32.totalorder %s72, %s75
    %p84 = scmp.eq.s32.totalorder %s19, 3
    %p85 = por %p83, %p84
    %p86 = scmp.ne.s32.totalorder %s75, %s76
    %p87 = scmp.eq.s32.totalorder %s19, 0
    %p88 = por %p86, %p87
    %p89 = scmp.ne.s32.totalorder %s75, %s76
    %p90 = scmp.eq.s32.totalorder %s20, 3
    %p91 = por %p89, %p90
    %p93 = scmp.ne.s32.totalorder %s76, %s92
    %p94 = scmp.eq.s32.totalorder %s20, 0
    %p95 = por %p93, %p94
    %s96 = sadd.s32 %s22, 1
    %p97 = scmp.lt.s32.totalorder %s96, 1
    %s98 = scalar_select %p97, %s96, 1
    %s99 = sadd.s32 %s29, 1
    %p100 = scmp.lt.s32.totalorder %s99, 1
    %s101 = scalar_select %p100, %s99, 1
    %s102 = ssub.s32 %s21, %s33
    %s103 = ssub.s32 %s98, %s101
    %s104 = sor.u32 %s102, %s103
    %p105 = scmp.eq.s32.totalorder %s104, 0
    %s107 = sadd.s32 %s106, 1
    %s108 = scalar_select %p105, %s106, %s107
    %p111 = pneg %p105
    %p112 = scmp.eq.s32.totalorder %s14, 3
    %p113 = por %p111, %p112
    %p114 = scmp.ne.s32.totalorder %s106, %s109
    %p115 = scmp.eq.s32.totalorder %s14, 0
    %p116 = por %p114, %p115
    %p117 = scmp.ne.s32.totalorder %s106, %s109
    %p118 = scmp.eq.s32.totalorder %s19, 3
    %p119 = por %p117, %p118
    %p120 = scmp.ne.s32.totalorder %s109, %s110
    %p121 = scmp.eq.s32.totalorder %s19, 0
    %p122 = por %p120, %p121
    %p123 = scmp.ne.s32.totalorder %s109, %s110
    %p124 = scmp.eq.s32.totalorder %s20, 3
    %p125 = por %p123, %p124
    %p127 = scmp.ne.s32.totalorder %s110, %s126
    %p128 = scmp.eq.s32.totalorder %s20, 0
    %p129 = por %p127, %p128
    %s131 = sadd.s32 %s130, 1
    %p134 = scmp.eq.s32.totalorder %s14, 3
    %p135 = scmp.ne.s32.totalorder %s130, %s132
    %p136 = scmp.eq.s32.totalorder %s14, 0
    %p137 = por %p135, %p136
    %p138 = scmp.ne.s32.totalorder %s130, %s132
    %p139 = scmp.eq.s32.totalorder %s19, 3
    %p140 = por %p138, %p139
    %p141 = scmp.ne.s32.totalorder %s132, %s133
    %p142 = scmp.eq.s32.totalorder %s19, 0
    %p143 = por %p141, %p142
    %p144 = scmp.ne.s32.totalorder %s132, %s133
    %p145 = scmp.eq.s32.totalorder %s20, 3
    %p146 = por %p144, %p145
    %p148 = scmp.ne.s32.totalorder %s133, %s147
    %p149 = scmp.eq.s32.totalorder %s20, 0
    %p150 = por %p148, %p149
    %s152 = sadd.s32 %s151, 1
    %p155 = scmp.eq.s32.totalorder %s14, 3
    %p156 = scmp.ne.s32.totalorder %s151, %s153
    %p157 = scmp.eq.s32.totalorder %s14, 0
    %p158 = por %p156, %p157
    %p159 = scmp.ne.s32.totalorder %s151, %s153
    %p160 = scmp.eq.s32.totalorder %s19, 3
    %p161 = por %p159, %p160
    %p162 = scmp.ne.s32.totalorder %s153, %s154
    %p163 = scmp.eq.s32.totalorder %s19, 0
    %p164 = por %p162, %p163
    %p165 = scmp.ne.s32.totalorder %s153, %s154
    %p166 = scmp.eq.s32.totalorder %s20, 3
    %p167 = por %p165, %p166
    %p169 = scmp.ne.s32.totalorder %s154, %s168
    %p170 = scmp.eq.s32.totalorder %s20, 0
    %p171 = por %p169, %p170
    %s173 = sadd.s32 %s172, 1
    %p176 = scmp.eq.s32.totalorder %s14, 3
    %p177 = scmp.ne.s32.totalorder %s172, %s174
    %p178 = scmp.eq.s32.totalorder %s14, 0
    %p179 = por %p177, %p178
    %p180 = scmp.ne.s32.totalorder %s172, %s174
    %p181 = scmp.eq.s32.totalorder %s19, 3
    %p182 = por %p180, %p181
    %p183 = scmp.ne.s32.totalorder %s174, %s175
    %p184 = scmp.eq.s32.totalorder %s19, 0
    %p185 = por %p183, %p184
    %p186 = scmp.ne.s32.totalorder %s174, %s175
    %p187 = scmp.eq.s32.totalorder %s20, 3
    %p188 = por %p186, %p187
    %p190 = scmp.ne.s32.totalorder %s175, %s189
    %p191 = scmp.eq.s32.totalorder %s20, 0
    %p192 = por %p190, %p191
    %s193 = ssub.s32 %s21, %s33
    %s194 = ssub.s32 %s22, %s29
    %s195 = sor.u32 %s193, %s194
    %p196 = scmp.eq.s32.totalorder %s195, 0
    %s198 = sadd.s32 %s197, 1
    %s199 = scalar_select %p196, %s197, %s198
    %p202 = pneg %p196
    %p203 = scmp.eq.s32.totalorder %s14, 3
    %p204 = por %p202, %p203
    %p205 = scmp.ne.s32.totalorder %s197, %s200
    %p206 = scmp.eq.s32.totalorder %s14, 0
    %p207 = por %p205, %p206
    %p208 = scmp.ne.s32.totalorder %s197, %s200
    %p209 = scmp.eq.s32.totalorder %s19, 3
    %p210 = por %p208, %p209
    %p211 = scmp.ne.s32.totalorder %s200, %s201
    %p212 = scmp.eq.s32.totalorder %s19, 0
    %p213 = por %p211, %p212
    %p214 = scmp.ne.s32.totalorder %s200, %s201
    %p215 = scmp.eq.s32.totalorder %s20, 3
    %p216 = por %p214, %p215
    %p218 = scmp.ne.s32.totalorder %s201, %s217
    %p219 = scmp.eq.s32.totalorder %s20, 0
    %p220 = por %p218, %p219
    %s221 = ssub.s32 %s21, %s33
    %s222 = ssub.s32 %s22, %s29
    %s223 = sor.u32 %s221, %s222
    %p224 = scmp.eq.s32.totalorder %s223, 0
    %s226 = sadd.s32 %s225, 1
    %s227 = scalar_select %p224, %s225, %s226
    %p230 = pneg %p224
    %p231 = scmp.eq.s32.totalorder %s14, 3
    %p232 = por %p230, %p231
    %p233 = scmp.ne.s32.totalorder %s225, %s228
    %p234 = scmp.eq.s32.totalorder %s14, 0
    %p235 = por %p233, %p234
    %p236 = scmp.ne.s32.totalorder %s225, %s228
    %p237 = scmp.eq.s32.totalorder %s19, 3
    %p238 = por %p236, %p237
    %p239 = scmp.ne.s32.totalorder %s228, %s229
    %p240 = scmp.eq.s32.totalorder %s19, 0
    %p241 = por %p239, %p240
    %p242 = scmp.ne.s32.totalorder %s228, %s229
    %p243 = scmp.eq.s32.totalorder %s20, 3
    %p244 = por %p242, %p243
    %p246 = scmp.ne.s32.totalorder %s229, %s245
    %p247 = scmp.eq.s32.totalorder %s20, 0
    %p248 = por %p246, %p247
    %p249 = scmp.le.s32.totalorder 1, %s14
    %p250 = scmp.lt.s32.totalorder %s14, 5
    %p251 = pnand %p249, %p250
    %p252 = pneg %p251
    // Predicated region
    $region9: #{double_conv_forward.4} parent=5 // pred_check
      _
    $region10: #{double_conv_forward.4} parent=5 // pred_check_branch
      %254 = sbr.rel (%p251) target = $region12
    $region11: #{double_conv_forward.4} parent=5 // pred_region
      %s255 = ssub.s32 %s14, 1
      // Predicated region
      $region13: #{double_conv_forward.4} parent=11 // pred_check
        %p256 = pneg %p143
      $region14: #{double_conv_forward.4} parent=11 // pred_check_branch
        %258 = sbr.rel (%p256) target = $region16
      $region15: #{double_conv_forward.4} parent=11 // pred_region
        _
      $region16: #{double_conv_forward.4} parent=11 // pred_fallthru
        _
      // Predicated region
      $region17: #{double_conv_forward.4} parent=11 // pred_check
        %p259 = pneg %p164
      $region18: #{double_conv_forward.4} parent=11 // pred_check_branch
        %261 = sbr.rel (%p259) target = $region20
      $region19: #{double_conv_forward.4} parent=11 // pred_region
        _
      $region20: #{double_conv_forward.4} parent=11 // pred_fallthru
        _
      // Predicated region
      $region21: #{double_conv_forward.4} parent=11 // pred_check
        %p262 = pneg %p185
      $region22: #{double_conv_forward.4} parent=11 // pred_check_branch
        %264 = sbr.rel (%p262) target = $region24
      $region23: #{double_conv_forward.4} parent=11 // pred_region
        _
      $region24: #{double_conv_forward.4} parent=11 // pred_fallthru
        _
    $region12: #{double_conv_forward.4} parent=5 // pred_fallthru
      _
    %p265 = scmp.lt.s32.totalorder %s14, 4
    // Predicated region
    $region25: #{double_conv_forward.4} parent=5 // pred_check
      %p266 = pneg %p265
    $region26: #{double_conv_forward.4} parent=5 // pred_check_branch
      %268 = sbr.rel (%p266) target = $region28
    $region27: #{double_conv_forward.4} parent=5 // pred_region
      // Predicated region
      $region29: #{double_conv_forward.4} parent=27 // pred_check
        %p269 = pneg %p48
      $region30: #{double_conv_forward.4} parent=27 // pred_check_branch
        %271 = sbr.rel (%p269) target = $region32
      $region31: #{double_conv_forward.4} parent=27 // pred_region
        %p272 = scmp.lt.s32.totalorder %s21, 1
        %s273 = scalar_select %p272, %s21, 1
        %p274 = scmp.lt.s32.totalorder %s22, 1
        %s275 = scalar_select %p274, %s22, 1
        %s276 = smul.addr %s273, 2
        %s277 = sadd.s32 %s275, %s276
        %s278 = smul.addr %s277, 4
        %s279 = scalar_lea.vmem %s0, %s278
      $region32: #{double_conv_forward.4} parent=27 // pred_fallthru
        _
      // Predicated region
      $region33: #{double_conv_forward.4} parent=27 // pred_check
        %p280 = pneg %p82
      $region34: #{double_conv_forward.4} parent=27 // pred_check_branch
        %282 = sbr.rel (%p280) target = $region36
      $region35: #{double_conv_forward.4} parent=27 // pred_region
        %s283 = ssub.s32 %s22, 1
        %p284 = scmp.gt.s32.totalorder %s283, 0
        %s285 = scalar_select %p284, %s283, 0
        %p286 = scmp.lt.s32.totalorder %s21, 1
        %s287 = scalar_select %p286, %s21, 1
        %p288 = scmp.lt.s32.totalorder %s285, 1
        %s289 = scalar_select %p288, %s285, 1
        %s290 = smul.addr %s287, 2
        %s291 = sadd.s32 %s289, %s290
        %s292 = smul.addr %s291, 4
        %s293 = scalar_lea.vmem %s1, %s292
        %s294 = ssub.s32 %s22, 1
        %p295 = scmp.gt.s32.totalorder %s294, 0
        %s296 = scalar_select %p295, %s294, 0
      $region36: #{double_conv_forward.4} parent=27 // pred_fallthru
        _
      // Predicated region
      $region37: #{double_conv_forward.4} parent=27 // pred_check
        %p297 = pneg %p116
      $region38: #{double_conv_forward.4} parent=27 // pred_check_branch
        %299 = sbr.rel (%p297) target = $region40
      $region39: #{double_conv_forward.4} parent=27 // pred_region
        %s300 = sadd.s32 %s22, 1
        %p301 = scmp.lt.s32.totalorder %s300, 1
        %s302 = scalar_select %p301, %s300, 1
        %p303 = scmp.lt.s32.totalorder %s21, 1
        %s304 = scalar_select %p303, %s21, 1
        %p305 = scmp.lt.s32.totalorder %s302, 1
        %s306 = scalar_select %p305, %s302, 1
        %s307 = smul.addr %s304, 2
        %s308 = sadd.s32 %s306, %s307
        %s309 = smul.addr %s308, 4
        %s310 = scalar_lea.vmem %s2, %s309
        %s311 = sadd.s32 %s22, 1
        %p312 = scmp.lt.s32.totalorder %s311, 1
        %s313 = scalar_select %p312, %s311, 1
      $region40: #{double_conv_forward.4} parent=27 // pred_fallthru
        _
    $region28: #{double_conv_forward.4} parent=5 // pred_fallthru
      _
    %p314 = scmp.le.s32.totalorder 1, %s14
    %p315 = scmp.lt.s32.totalorder %s14, 5
    %p316 = pnand %p314, %p315
    %p317 = pneg %p316
    // Predicated region
    $region41: #{double_conv_forward.4} parent=5 // pred_check
      _
    $region42: #{double_conv_forward.4} parent=5 // pred_check_branch
      %319 = sbr.rel (%p316) target = $region44
    $region43: #{double_conv_forward.4} parent=5 // pred_region
      %s320 = ssub.s32 %s14, 1
      %p321 = scmp.lt.s32.totalorder %s23, 1
      %s322 = scalar_select %p321, %s23, 1
      %p323 = scmp.lt.s32.totalorder %s24, 1
      %s324 = scalar_select %p323, %s24, 1
      %s325 = smul.addr %s322, 2
      %s326 = sadd.s32 %s324, %s325
      %s327 = smul.addr %s326, 4
      %s328 = scalar_lea.vmem %s0, %s327
      %p329 = pneg %p54
      %p330 = pneg %p51
      %s331 = ssub.s32 %s24, 1
      %p332 = scmp.gt.s32.totalorder %s331, 0
      %s333 = scalar_select %p332, %s331, 0
      %p334 = scmp.lt.s32.totalorder %s23, 1
      %s335 = scalar_select %p334, %s23, 1
      %p336 = scmp.lt.s32.totalorder %s333, 1
      %s337 = scalar_select %p336, %s333, 1
      %s338 = smul.addr %s335, 2
      %s339 = sadd.s32 %s337, %s338
      %s340 = smul.addr %s339, 4
      %s341 = scalar_lea.vmem %s1, %s340
      %p342 = pneg %p88
      %p343 = pneg %p85
      %s344 = sadd.s32 %s24, 1
      %p345 = scmp.lt.s32.totalorder %s344, 1
      %s346 = scalar_select %p345, %s344, 1
      %p347 = scmp.lt.s32.totalorder %s23, 1
      %s348 = scalar_select %p347, %s23, 1
      %p349 = scmp.lt.s32.totalorder %s346, 1
      %s350 = scalar_select %p349, %s346, 1
      %s351 = smul.addr %s348, 2
      %s352 = sadd.s32 %s350, %s351
      %s353 = smul.addr %s352, 4
      %s354 = scalar_lea.vmem %s2, %s353
      %p355 = pneg %p122
      %p356 = pneg %p119
      %p357 = pneg %p143
      %p358 = pneg %p140
      %p359 = pneg %p164
      %p360 = pneg %p161
      %p361 = pneg %p185
      %p362 = pneg %p182
      %p363 = pneg %p213
      %p364 = pneg %p210
      %p365 = scmp.lt.s32.totalorder %s23, 1
      %s366 = scalar_select %p365, %s23, 1
      %p367 = scmp.lt.s32.totalorder %s24, 1
      %s368 = scalar_select %p367, %s24, 1
      %s369 = smul.addr %s366, 2
      %s370 = sadd.s32 %s368, %s369
      %s371 = smul.addr %s370, 4
      %s372 = scalar_lea.vmem %s6, %s371
      %p373 = pneg %p241
      %p374 = pneg %p238
      %p375 = scmp.lt.s32.totalorder %s23, 1
      %s376 = scalar_select %p375, %s23, 1
      %p377 = scmp.lt.s32.totalorder %s24, 1
      %s378 = scalar_select %p377, %s24, 1
      %s379 = smul.addr %s376, 2
      %s380 = sadd.s32 %s378, %s379
      %s381 = smul.addr %s380, 2
      %s382 = scalar_lea.vmem %s7, %s381
      %p383 = scmp.lt.s32.totalorder %s23, 1
      %s384 = scalar_select %p383, %s23, 1
      %p385 = scmp.lt.s32.totalorder %s24, 1
      %s386 = scalar_select %p385, %s24, 1
      %s387 = smul.addr %s384, 2
      %s388 = sadd.s32 %s386, %s387
      %s389 = smul.addr %s388, 4
      %s390 = scalar_lea.vmem %s0, %s389
      %s391 = ssub.s32 %s24, 1
      %p392 = scmp.gt.s32.totalorder %s391, 0
      %s393 = scalar_select %p392, %s391, 0
      %p394 = scmp.lt.s32.totalorder %s23, 1
      %s395 = scalar_select %p394, %s23, 1
      %p396 = scmp.lt.s32.totalorder %s393, 1
      %s397 = scalar_select %p396, %s393, 1
      %s398 = smul.addr %s395, 2
      %s399 = sadd.s32 %s397, %s398
      %s400 = smul.addr %s399, 4
      %s401 = scalar_lea.vmem %s1, %s400
      %s402 = ssub.s32 %s24, 1
      %p403 = scmp.gt.s32.totalorder %s402, 0
      %s404 = scalar_select %p403, %s402, 0
      %s405 = sadd.s32 %s24, 1
      %p406 = scmp.lt.s32.totalorder %s405, 1
      %s407 = scalar_select %p406, %s405, 1
      %p408 = scmp.lt.s32.totalorder %s23, 1
      %s409 = scalar_select %p408, %s23, 1
      %p410 = scmp.lt.s32.totalorder %s407, 1
      %s411 = scalar_select %p410, %s407, 1
      %s412 = smul.addr %s409, 2
      %s413 = sadd.s32 %s411, %s412
      %s414 = smul.addr %s413, 4
      %s415 = scalar_lea.vmem %s2, %s414
      %s416 = sadd.s32 %s24, 1
      %p417 = scmp.lt.s32.totalorder %s416, 1
      %s418 = scalar_select %p417, %s416, 1
      %p419 = scmp.lt.s32.totalorder %s23, 1
      %s420 = scalar_select %p419, %s23, 1
      %p421 = scmp.lt.s32.totalorder %s24, 1
      %s422 = scalar_select %p421, %s24, 1
      %s423 = smul.addr %s420, 2
      %s424 = sadd.s32 %s422, %s423
      %s425 = smul.addr %s424, 4
      %s426 = scalar_lea.vmem %s6, %s425
      %p427 = scmp.lt.s32.totalorder %s23, 1
      %s428 = scalar_select %p427, %s23, 1
      %p429 = scmp.lt.s32.totalorder %s24, 1
      %s430 = scalar_select %p429, %s24, 1
      %s431 = smul.addr %s428, 2
      %s432 = sadd.s32 %s430, %s431
      %s433 = smul.addr %s432, 2
      %s434 = scalar_lea.vmem %s7, %s433
      %v436 = vld [vmem:[%s390] sm:$0xf]
      %v437 = vunpack.c.l.bf16 %v436
      %v438 = vld [vmem:[%s401] sm:$0x8]
      %v439 = vunpack.c.l.bf16 %v438
      %v440 = vld [vmem:[%s415] sm:$0x1]
      %v441 = vunpack.c.l.bf16 %v440
      %v442 = vld [vmem:[%s4] sm:$0x1]
      %v443 = vld [vmem:[%s5] sm:$0x1]
      %v445 = vlaneseq
      %v446 = vshrl.u32 %v445, 7
      %v447 = vsub.s32 0, %v446
      %v448 = vrot.slane %v442, %v447
      %v450 = vmul.f32 %v437, %v448
      %v452 = vlaneseq
      %v453 = vshrl.u32 %v452, 7
      %v454 = vsub.s32 0, %v453
      %v455 = vrot.slane %v443, %v454
      %v457 = vadd.f32 %v450, %v455
      %v458 = vmax.f32 %v457, 0.0
      %v459 = vmul.f32 %v439, %v448
      %v460 = vadd.f32 %v459, %v455
      %v461 = vmax.f32 %v460, 0.0
      %v462 = vmul.f32 %v441, %v442
      %v463 = vadd.f32 %v462, %v443
      %v464 = vmax.f32 %v463, 0.0
      %p465 = scmp.gt.s32.totalorder %s24, 0
      %s466 = scalar_select %p465, 1, 0
      %v467 = vstv %s466
      %vm468 = vcmp.eq.s32.totalorder %v467, 1
      %v469 = vsel %vm468, %v461, 0.0
      %p470 = scmp.lt.s32.totalorder %s24, 1
      %s471 = scalar_select %p470, 1, 0
      %v472 = vstv %s471
      %vm473 = vcmp.eq.s32.totalorder %v472, 1
      %v474 = vsel %vm473, %v464, 0.0
      %v476 = vrot.slane %v469, 7
      %v479 = vrot.slane %v458, 7
      %v482 = vrot.slane %v474, 7
      %vm484 = vcmask 1040384
      %v485 = vsel %vm484, %v476, %v479
      %v486 = vsel %vm484, %v479, %v482
      %v487 = vpack.c.bf16 %v486, %v485
      %v488 = vld [vmem:[%s3] sm:$0xf]
      %v489 = vld [vmem:[%s3 + $0x4] sm:$0xf]
      %v490 = vld [vmem:[%s3 + $0x8] sm:$0xf]
      %v491 = vld [vmem:[%s3 + $0xc] sm:$0xf]
      %v492 = vld [vmem:[%s3 + $0x10] sm:$0xf]
      %v493 = vld [vmem:[%s3 + $0x14] sm:$0xf]
      %v494 = vld [vmem:[%s3 + $0x18] sm:$0xf]
      %v495 = vld [vmem:[%s3 + $0x1c] sm:$0xf]
      %v496 = vld [vmem:[%s3 + $0x20] sm:$0xf]
      %v497 = vld [vmem:[%s3 + $0x24] sm:$0xf]
      %v498 = vld [vmem:[%s3 + $0x28] sm:$0xf]
      %v499 = vld [vmem:[%s3 + $0x2c] sm:$0xf]
      %v500 = vld [vmem:[%s3 + $0x30] sm:$0xf]
      %v501 = vld [vmem:[%s3 + $0x34] sm:$0xf]
      %v502 = vld [vmem:[%s3 + $0x38] sm:$0xf]
      %v503 = vld [vmem:[%s3 + $0x3c] sm:$0xf]
      %s504 = scalar_lea.vmem %s3, 64
      %v505 = vld [vmem:[%s504] sm:$0xf]
      %v506 = vld [vmem:[%s504 + $0x4] sm:$0xf]
      %v507 = vld [vmem:[%s504 + $0x8] sm:$0xf]
      %v508 = vld [vmem:[%s504 + $0xc] sm:$0xf]
      %v509 = vld [vmem:[%s504 + $0x10] sm:$0xf]
      %v510 = vld [vmem:[%s504 + $0x14] sm:$0xf]
      %v511 = vld [vmem:[%s504 + $0x18] sm:$0xf]
      %v512 = vld [vmem:[%s504 + $0x1c] sm:$0xf]
      %v513 = vld [vmem:[%s504 + $0x20] sm:$0xf]
      %v514 = vld [vmem:[%s504 + $0x24] sm:$0xf]
      %v515 = vld [vmem:[%s504 + $0x28] sm:$0xf]
      %v516 = vld [vmem:[%s504 + $0x2c] sm:$0xf]
      %v517 = vld [vmem:[%s504 + $0x30] sm:$0xf]
      %v518 = vld [vmem:[%s504 + $0x34] sm:$0xf]
      %v519 = vld [vmem:[%s504 + $0x38] sm:$0xf]
      %v520 = vld [vmem:[%s504 + $0x3c] sm:$0xf]
      %v522 = vshrl.u32 %v487, 16
      %v524 = vshll.u32 %v487, 16
      %v526 = vrot.slane %v524, 1
      %v527 = vor.u32 %v522, %v526
      %v545 = vunpack.c.l.b16 %v505
      %v546 = vunpack.c.l.b16 %v506
      %v547 = vunpack.c.l.b16 %v507
      %v548 = vunpack.c.l.b16 %v508
      %v549 = vunpack.c.l.b16 %v509
      %v550 = vunpack.c.l.b16 %v510
      %v551 = vunpack.c.l.b16 %v511
      %v552 = vunpack.c.l.b16 %v512
      %v553 = vunpack.c.l.b16 %v513
      %v554 = vunpack.c.l.b16 %v514
      %v555 = vunpack.c.l.b16 %v515
      %v556 = vunpack.c.l.b16 %v516
      %v557 = vunpack.c.l.b16 %v517
      %v558 = vunpack.c.l.b16 %v518
      %v559 = vunpack.c.l.b16 %v519
      %v560 = vunpack.c.l.b16 %v520
      %v561 = vpack.c.b16 %v546, %v545
      %v562 = vpack.c.b16 %v548, %v547
      %v563 = vpack.c.b16 %v550, %v549
      %v564 = vpack.c.b16 %v552, %v551
      %v565 = vpack.c.b16 %v554, %v553
      %v566 = vpack.c.b16 %v556, %v555
      %v567 = vpack.c.b16 %v558, %v557
      %v568 = vpack.c.b16 %v560, %v559
      %577 = vmatprep.subr.bf16.mxu0 0
      %578 = vmatpush1.bf16.msra.mxu0 %v561
      %579 = vmatprep.subr.bf16.mxu0 0
      %580 = vmatpush1.bf16.msra.mxu0 %v562
      %581 = vmatprep.subr.bf16.mxu0 0
      %582 = vmatpush1.bf16.msra.mxu0 %v563
      %583 = vmatprep.subr.bf16.mxu0 0
      %584 = vmatpush1.bf16.msra.mxu0 %v564
      %585 = vmatprep.subr.bf16.mxu0 0
      %586 = vmatpush1.bf16.msra.mxu0 %v565
      %587 = vmatprep.subr.bf16.mxu0 0
      %588 = vmatpush1.bf16.msra.mxu0 %v566
      %589 = vmatprep.subr.bf16.mxu0 0
      %590 = vmatpush1.bf16.msra.mxu0 %v567
      %591 = vmatprep.subr.bf16.mxu0 0
      %592 = vmatpush1.bf16.msra.mxu0 %v568
      %593 = vmatprep.subr.bf16.mxu0 0
      %594 = vmatpush1.bf16.msra.mxu0 0
      %595 = vmatprep.subr.bf16.mxu0 0
      %596 = vmatpush1.bf16.msra.mxu0 0
      %597 = vmatprep.subr.bf16.mxu0 0
      %598 = vmatpush1.bf16.msra.mxu0 0
      %599 = vmatprep.subr.bf16.mxu0 0
      %600 = vmatpush1.bf16.msra.mxu0 0
      %601 = vmatprep.subr.bf16.mxu0 0
      %602 = vmatpush1.bf16.msra.mxu0 0
      %603 = vmatprep.subr.bf16.mxu0 0
      %604 = vmatpush1.bf16.msra.mxu0 0
      %605 = vmatprep.subr.bf16.mxu0 0
      %606 = vmatpush1.bf16.msra.mxu0 0
      %607 = vmatprep.subr.bf16.mxu0 0
      %608 = vmatpush1.bf16.msra.mxu0 0
      %609 = vmatprep.mubr.bf16.mxu0 0
      %610 = vmatmul.mubr.bf16.gmra.mrb[0].mxu0 %v527
      %v611 = vpop.f32.mrb[0].mxu0
      %v612 = vadd.f32 0.0, %v611
      %v613 = vpop.f32.mrb[0].mxu0
      %v614 = vpop.f32.mrb[0].mxu0
      %v615 = vpop.f32.mrb[0].mxu0
      %616 = vdwg.mxu0
      %v633 = vunpack.c.l.b16 %v488
      %v634 = vunpack.c.l.b16 %v489
      %v635 = vunpack.c.l.b16 %v490
      %v636 = vunpack.c.l.b16 %v491
      %v637 = vunpack.c.l.b16 %v492
      %v638 = vunpack.c.l.b16 %v493
      %v639 = vunpack.c.l.b16 %v494
      %v640 = vunpack.c.l.b16 %v495
      %v641 = vunpack.c.l.b16 %v496
      %v642 = vunpack.c.l.b16 %v497
      %v643 = vunpack.c.l.b16 %v498
      %v644 = vunpack.c.l.b16 %v499
      %v645 = vunpack.c.l.b16 %v500
      %v646 = vunpack.c.l.b16 %v501
      %v647 = vunpack.c.l.b16 %v502
      %v648 = vunpack.c.l.b16 %v503
      %v649 = vpack.c.b16 %v634, %v633
      %v650 = vpack.c.b16 %v636, %v635
      %v651 = vpack.c.b16 %v638, %v637
      %v652 = vpack.c.b16 %v640, %v639
      %v653 = vpack.c.b16 %v642, %v641
      %v654 = vpack.c.b16 %v644, %v643
      %v655 = vpack.c.b16 %v646, %v645
      %v656 = vpack.c.b16 %v648, %v647
      %665 = vmatprep.subr.bf16.mxu0 0
      %666 = vmatpush1.bf16.msra.mxu0 %v649
      %667 = vmatprep.subr.bf16.mxu0 0
      %668 = vmatpush1.bf16.msra.mxu0 %v650
      %669 = vmatprep.subr.bf16.mxu0 0
      %670 = vmatpush1.bf16.msra.mxu0 %v651
      %671 = vmatprep.subr.bf16.mxu0 0
      %672 = vmatpush1.bf16.msra.mxu0 %v652
      %673 = vmatprep.subr.bf16.mxu0 0
      %674 = vmatpush1.bf16.msra.mxu0 %v653
      %675 = vmatprep.subr.bf16.mxu0 0
      %676 = vmatpush1.bf16.msra.mxu0 %v654
      %677 = vmatprep.subr.bf16.mxu0 0
      %678 = vmatpush1.bf16.msra.mxu0 %v655
      %679 = vmatprep.subr.bf16.mxu0 0
      %680 = vmatpush1.bf16.msra.mxu0 %v656
      %681 = vmatprep.subr.bf16.mxu0 0
      %682 = vmatpush1.bf16.msra.mxu0 0
      %683 = vmatprep.subr.bf16.mxu0 0
      %684 = vmatpush1.bf16.msra.mxu0 0
      %685 = vmatprep.subr.bf16.mxu0 0
      %686 = vmatpush1.bf16.msra.mxu0 0
      %687 = vmatprep.subr.bf16.mxu0 0
      %688 = vmatpush1.bf16.msra.mxu0 0
      %689 = vmatprep.subr.bf16.mxu0 0
      %690 = vmatpush1.bf16.msra.mxu0 0
      %691 = vmatprep.subr.bf16.mxu0 0
      %692 = vmatpush1.bf16.msra.mxu0 0
      %693 = vmatprep.subr.bf16.mxu0 0
      %694 = vmatpush1.bf16.msra.mxu0 0
      %695 = vmatprep.subr.bf16.mxu0 0
      %696 = vmatpush1.bf16.msra.mxu0 0
      %697 = vmatprep.mubr.bf16.mxu0 0
      %698 = vmatmul.mubr.bf16.gmra.mrb[0].mxu0 %v487
      %v699 = vpop.f32.mrb[0].mxu0
      %v700 = vadd.f32 %v612, %v699
      %v701 = vpop.f32.mrb[0].mxu0
      %v702 = vpop.f32.mrb[0].mxu0
      %v703 = vpop.f32.mrb[0].mxu0
      %704 = vdwg.mxu0
      %s705 = scalar_lea.vmem %s3, 128
      %v706 = vld [vmem:[%s705] sm:$0xf]
      %v707 = vld [vmem:[%s705 + $0x4] sm:$0xf]
      %v708 = vld [vmem:[%s705 + $0x8] sm:$0xf]
      %v709 = vld [vmem:[%s705 + $0xc] sm:$0xf]
      %v710 = vld [vmem:[%s705 + $0x10] sm:$0xf]
      %v711 = vld [vmem:[%s705 + $0x14] sm:$0xf]
      %v712 = vld [vmem:[%s705 + $0x18] sm:$0xf]
      %v713 = vld [vmem:[%s705 + $0x1c] sm:$0xf]
      %v714 = vld [vmem:[%s705 + $0x20] sm:$0xf]
      %v715 = vld [vmem:[%s705 + $0x24] sm:$0xf]
      %v716 = vld [vmem:[%s705 + $0x28] sm:$0xf]
      %v717 = vld [vmem:[%s705 + $0x2c] sm:$0xf]
      %v718 = vld [vmem:[%s705 + $0x30] sm:$0xf]
      %v719 = vld [vmem:[%s705 + $0x34] sm:$0xf]
      %v720 = vld [vmem:[%s705 + $0x38] sm:$0xf]
      %v721 = vld [vmem:[%s705 + $0x3c] sm:$0xf]
      %v723 = vrot.slane %v487, 1
      %v741 = vunpack.c.l.b16 %v706
      %v742 = vunpack.c.l.b16 %v707
      %v743 = vunpack.c.l.b16 %v708
      %v744 = vunpack.c.l.b16 %v709
      %v745 = vunpack.c.l.b16 %v710
      %v746 = vunpack.c.l.b16 %v711
      %v747 = vunpack.c.l.b16 %v712
      %v748 = vunpack.c.l.b16 %v713
      %v749 = vunpack.c.l.b16 %v714
      %v750 = vunpack.c.l.b16 %v715
      %v751 = vunpack.c.l.b16 %v716
      %v752 = vunpack.c.l.b16 %v717
      %v753 = vunpack.c.l.b16 %v718
      %v754 = vunpack.c.l.b16 %v719
      %v755 = vunpack.c.l.b16 %v720
      %v756 = vunpack.c.l.b16 %v721
      %v757 = vpack.c.b16 %v742, %v741
      %v758 = vpack.c.b16 %v744, %v743
      %v759 = vpack.c.b16 %v746, %v745
      %v760 = vpack.c.b16 %v748, %v747
      %v761 = vpack.c.b16 %v750, %v749
      %v762 = vpack.c.b16 %v752, %v751
      %v763 = vpack.c.b16 %v754, %v753
      %v764 = vpack.c.b16 %v756, %v755
      %773 = vmatprep.subr.bf16.mxu0 0
      %774 = vmatpush1.bf16.msra.mxu0 %v757
      %775 = vmatprep.subr.bf16.mxu0 0
      %776 = vmatpush1.bf16.msra.mxu0 %v758
      %777 = vmatprep.subr.bf16.mxu0 0
      %778 = vmatpush1.bf16.msra.mxu0 %v759
      %779 = vmatprep.subr.bf16.mxu0 0
      %780 = vmatpush1.bf16.msra.mxu0 %v760
      %781 = vmatprep.subr.bf16.mxu0 0
      %782 = vmatpush1.bf16.msra.mxu0 %v761
      %783 = vmatprep.subr.bf16.mxu0 0
      %784 = vmatpush1.bf16.msra.mxu0 %v762
      %785 = vmatprep.subr.bf16.mxu0 0
      %786 = vmatpush1.bf16.msra.mxu0 %v763
      %787 = vmatprep.subr.bf16.mxu0 0
      %788 = vmatpush1.bf16.msra.mxu0 %v764
      %789 = vmatprep.subr.bf16.mxu0 0
      %790 = vmatpush1.bf16.msra.mxu0 0
      %791 = vmatprep.subr.bf16.mxu0 0
      %792 = vmatpush1.bf16.msra.mxu0 0
      %793 = vmatprep.subr.bf16.mxu0 0
      %794 = vmatpush1.bf16.msra.mxu0 0
      %795 = vmatprep.subr.bf16.mxu0 0
      %796 = vmatpush1.bf16.msra.mxu0 0
      %797 = vmatprep.subr.bf16.mxu0 0
      %798 = vmatpush1.bf16.msra.mxu0 0
      %799 = vmatprep.subr.bf16.mxu0 0
      %800 = vmatpush1.bf16.msra.mxu0 0
      %801 = vmatprep.subr.bf16.mxu0 0
      %802 = vmatpush1.bf16.msra.mxu0 0
      %803 = vmatprep.subr.bf16.mxu0 0
      %804 = vmatpush1.bf16.msra.mxu0 0
      %805 = vmatprep.mubr.bf16.mxu0 0
      %806 = vmatmul.mubr.bf16.gmra.mrb[0].mxu0 %v723
      %v807 = vpop.f32.mrb[0].mxu0
      %v808 = vadd.f32 0.0, %v807
      %v809 = vpop.f32.mrb[0].mxu0
      %v810 = vpop.f32.mrb[0].mxu0
      %v811 = vpop.f32.mrb[0].mxu0
      %812 = vdwg.mxu0
      %v813 = vadd.f32 %v700, %v808
      %v814 = vpack.c.bf16 %v813, %v813
      %815 = vst [vmem:[%s426] sm:$0xf] %v814
      %v816 = vrot.slane %v813, 4
      %v817 = vadd.f32 %v813, %v816
      %v818 = vrot.slane %v817, 2
      %v819 = vadd.f32 %v817, %v818
      %v820 = vrot.slane %v819, 1
      %v821 = vadd.f32 %v819, %v820
      %v822 = vmul.f32 %v813, %v813
      %v823 = vrot.slane %v822, 4
      %v824 = vadd.f32 %v822, %v823
      %v825 = vrot.slane %v824, 2
      %v826 = vadd.f32 %v824, %v825
      %v827 = vrot.slane %v826, 1
      %v828 = vadd.f32 %v826, %v827
      %v829 = vsel %vm484, %v821, %v828
      %830 = vst [vmem:[%s434] sm:$0x3] %v829
      %p831 = scmp.lt.s32.totalorder %s23, 1
      %s832 = scalar_select %p831, %s23, 1
      %p833 = scmp.lt.s32.totalorder %s24, 1
      %s834 = scalar_select %p833, %s24, 1
      %s835 = smul.addr %s832, 2
      %s836 = sadd.s32 %s834, %s835
      %s837 = smul.addr %s836, 4
      %s838 = scalar_lea.vmem %s6, %s837
      %p839 = scmp.lt.s32.totalorder %s23, 1
      %s840 = scalar_select %p839, %s23, 1
      %p841 = scmp.lt.s32.totalorder %s24, 1
      %s842 = scalar_select %p841, %s24, 1
      %s843 = smul.addr %s840, 2
      %s844 = sadd.s32 %s842, %s843
      %s845 = smul.addr %s844, 2
      %s846 = scalar_lea.vmem %s7, %s845
      // Predicated region
      $region45: #{double_conv_forward.4} parent=43 // pred_check
        %p847 = pneg %p210
      $region46: #{double_conv_forward.4} parent=43 // pred_check_branch
        %849 = sbr.rel (%p847) target = $region48
      $region47: #{double_conv_forward.4} parent=43 // pred_region
        _
      $region48: #{double_conv_forward.4} parent=43 // pred_fallthru
        _
      // Predicated region
      $region49: #{double_conv_forward.4} parent=43 // pred_check
        %p850 = pneg %p238
      $region50: #{double_conv_forward.4} parent=43 // pred_check_branch
        %852 = sbr.rel (%p850) target = $region52
      $region51: #{double_conv_forward.4} parent=43 // pred_region
        _
      $region52: #{double_conv_forward.4} parent=43 // pred_fallthru
        _
    $region44: #{double_conv_forward.4} parent=5 // pred_fallthru
      _
    %p853 = scmp.le.s32.totalorder 2, %s14
    // Predicated region
    $region53: #{double_conv_forward.4} parent=5 // pred_check
      %p854 = pneg %p853
    $region54: #{double_conv_forward.4} parent=5 // pred_check_branch
      %856 = sbr.rel (%p854) target = $region56
    $region55: #{double_conv_forward.4} parent=5 // pred_region
      %s857 = ssub.s32 %s14, 2
      // Predicated region
      $region57: #{double_conv_forward.4} parent=55 // pred_check
        %p858 = pneg %p216
      $region58: #{double_conv_forward.4} parent=55 // pred_check_branch
        %860 = sbr.rel (%p858) target = $region60
      $region59: #{double_conv_forward.4} parent=55 // pred_region
        %p861 = scmp.lt.s32.totalorder %s25, 1
        %s862 = scalar_select %p861, %s25, 1
        %p863 = scmp.lt.s32.totalorder %s26, 1
        %s864 = scalar_select %p863, %s26, 1
        %s865 = smul.addr %s862, 2
        %s866 = sadd.s32 %s864, %s865
        %s867 = smul.addr %s866, 4
        %s868 = scalar_lea.vmem %s6, %s867
      $region60: #{double_conv_forward.4} parent=55 // pred_fallthru
        _
      // Predicated region
      $region61: #{double_conv_forward.4} parent=55 // pred_check
        %p869 = pneg %p244
      $region62: #{double_conv_forward.4} parent=55 // pred_check_branch
        %871 = sbr.rel (%p869) target = $region64
      $region63: #{double_conv_forward.4} parent=55 // pred_region
        %p872 = scmp.lt.s32.totalorder %s25, 1
        %s873 = scalar_select %p872, %s25, 1
        %p874 = scmp.lt.s32.totalorder %s26, 1
        %s875 = scalar_select %p874, %s26, 1
        %s876 = smul.addr %s873, 2
        %s877 = sadd.s32 %s875, %s876
        %s878 = smul.addr %s877, 2
        %s879 = scalar_lea.vmem %s7, %s878
      $region64: #{double_conv_forward.4} parent=55 // pred_fallthru
        _
    $region56: #{double_conv_forward.4} parent=5 // pred_fallthru
      _
  $region6: #{double_conv_forward.4} parent=0 // loop_footer
    %s18 = sadd.s32 1, %s14
  $region7: #{double_conv_forward.4} parent=0 // loop_footer_branch
    %13 = sbr.rel target = $region3
  $region8: #{double_conv_forward.4} parent=0 // loop_exit
    _

// kernel: double_conv_forward.5
$region0: #{double_conv_forward.5}
  #allocation0 [shape = 'u32[]', space=smem, size = 0x4, offset = 0x4, fixed_abs, tag = 'smem constant byte address 0x4 - core index']
  #allocation1 [shape = 'u32[144,128]{1,0:T(1,128)}', space=vmem, size = 0x12000, scoped, tag = 'internal scratch']
  %s0 = inlined_call_operand.vmem [shape: bf16[2,16,128], index: 0, kind: input, shape index: {}]
  %s1 = inlined_call_operand.vmem [shape: f32[1,128], index: 1, kind: input, shape index: {}]
  %s2 = inlined_call_operand.vmem [shape: f32[1,128], index: 2, kind: input, shape index: {}]
  %s3 = inlined_call_operand.vmem [shape: f32[2,16,128], index: 3, kind: output, shape index: {}]
  %s4 = sld [smem:[#allocation0]]
  $region45: #{double_conv_forward.5} parent=0
    _
  %s6 = ssub.s32 1, %s4
  %s7 = scalar_select 0, %s6, %s4
  loop: start=0, step=1, limit=6
  $region2: #{double_conv_forward.5} parent=0 // loop_pre_header
    _
  $region3: #{double_conv_forward.5} parent=0 // loop_header
    %s9 = sphi 0, %s13
    %p10 = scmp.ge.s32.totalorder %s9, 6
    %s16 = sphi 0, %s28
    %s17 = sphi 0, %s24
    %s18 = sphi 0, %s16
    %s19 = sphi 0, %s17
    %s20 = sphi 0, %s18
    %s21 = sphi 0, %s19
    %s33 = sphi 0, %s35
    %s36 = sphi 0, %s33
    %s37 = sphi 0, %s36
    %s53 = sphi 0, %s37
    %s57 = sphi 0, %s57
    %s59 = sphi 0, %s57
    %s60 = sphi 0, %s59
    %s74 = sphi 0, %s60
    %s78 = sphi 0, %s78
    %s80 = sphi 0, %s78
    %s81 = sphi 0, %s80
    %s95 = sphi 0, %s81
    %s103 = sphi 0, %s105
    %s106 = sphi 0, %s103
    %s107 = sphi 0, %s106
    %s123 = sphi 0, %s107
  $region4: #{double_conv_forward.5} parent=0 // loop_header_branch
    %12 = sbr.rel (%p10) target = $region8
  $region5: #{double_conv_forward.5} parent=0 // loop_body
    %s14 = ssub.s32 %s9, 1
    %s15 = ssub.s32 %s9, 2
    %s22 = sadd.s32 1, %s17
    %p23 = scmp.ge.s32.totalorder %s22, 2
    %s24 = scalar_select %p23, 0, %s22
    %s25 = sadd.s32 1, %s16
    %s26 = scalar_select %p23, %s25, %s16
    %p27 = scmp.ge.s32.totalorder %s26, 2
    %s28 = scalar_select %p27, 0, %s26
    %s29 = ssub.s32 %s16, %s28
    %s30 = ssub.s32 %s17, %s24
    %s31 = sor.u32 %s29, %s30
    %p32 = scmp.eq.s32.totalorder %s31, 0
    %s34 = sadd.s32 %s33, 1
    %s35 = scalar_select %p32, %s33, %s34
    %p38 = pneg %p32
    %p39 = scmp.eq.s32.totalorder %s9, 3
    %p40 = por %p38, %p39
    %p41 = scmp.ne.s32.totalorder %s33, %s36
    %p42 = scmp.eq.s32.totalorder %s9, 0
    %p43 = por %p41, %p42
    %p44 = scmp.ne.s32.totalorder %s33, %s36
    %p45 = scmp.eq.s32.totalorder %s14, 3
    %p46 = por %p44, %p45
    %p47 = scmp.ne.s32.totalorder %s36, %s37
    %p48 = scmp.eq.s32.totalorder %s14, 0
    %p49 = por %p47, %p48
    %p50 = scmp.ne.s32.totalorder %s36, %s37
    %p51 = scmp.eq.s32.totalorder %s15, 3
    %p52 = por %p50, %p51
    %p54 = scmp.ne.s32.totalorder %s37, %s53
    %p55 = scmp.eq.s32.totalorder %s15, 0
    %p56 = por %p54, %p55
    %s58 = sadd.s32 %s57, 1
    %p61 = scmp.eq.s32.totalorder %s9, 3
    %p62 = scmp.ne.s32.totalorder %s57, %s59
    %p63 = scmp.eq.s32.totalorder %s9, 0
    %p64 = por %p62, %p63
    %p65 = scmp.ne.s32.totalorder %s57, %s59
    %p66 = scmp.eq.s32.totalorder %s14, 3
    %p67 = por %p65, %p66
    %p68 = scmp.ne.s32.totalorder %s59, %s60
    %p69 = scmp.eq.s32.totalorder %s14, 0
    %p70 = por %p68, %p69
    %p71 = scmp.ne.s32.totalorder %s59, %s60
    %p72 = scmp.eq.s32.totalorder %s15, 3
    %p73 = por %p71, %p72
    %p75 = scmp.ne.s32.totalorder %s60, %s74
    %p76 = scmp.eq.s32.totalorder %s15, 0
    %p77 = por %p75, %p76
    %s79 = sadd.s32 %s78, 1
    %p82 = scmp.eq.s32.totalorder %s9, 3
    %p83 = scmp.ne.s32.totalorder %s78, %s80
    %p84 = scmp.eq.s32.totalorder %s9, 0
    %p85 = por %p83, %p84
    %p86 = scmp.ne.s32.totalorder %s78, %s80
    %p87 = scmp.eq.s32.totalorder %s14, 3
    %p88 = por %p86, %p87
    %p89 = scmp.ne.s32.totalorder %s80, %s81
    %p90 = scmp.eq.s32.totalorder %s14, 0
    %p91 = por %p89, %p90
    %p92 = scmp.ne.s32.totalorder %s80, %s81
    %p93 = scmp.eq.s32.totalorder %s15, 3
    %p94 = por %p92, %p93
    %p96 = scmp.ne.s32.totalorder %s81, %s95
    %p97 = scmp.eq.s32.totalorder %s15, 0
    %p98 = por %p96, %p97
    %s99 = ssub.s32 %s16, %s28
    %s100 = ssub.s32 %s17, %s24
    %s101 = sor.u32 %s99, %s100
    %p102 = scmp.eq.s32.totalorder %s101, 0
    %s104 = sadd.s32 %s103, 1
    %s105 = scalar_select %p102, %s103, %s104
    %p108 = pneg %p102
    %p109 = scmp.eq.s32.totalorder %s9, 3
    %p110 = por %p108, %p109
    %p111 = scmp.ne.s32.totalorder %s103, %s106
    %p112 = scmp.eq.s32.totalorder %s9, 0
    %p113 = por %p111, %p112
    %p114 = scmp.ne.s32.totalorder %s103, %s106
    %p115 = scmp.eq.s32.totalorder %s14, 3
    %p116 = por %p114, %p115
    %p117 = scmp.ne.s32.totalorder %s106, %s107
    %p118 = scmp.eq.s32.totalorder %s14, 0
    %p119 = por %p117, %p118
    %p120 = scmp.ne.s32.totalorder %s106, %s107
    %p121 = scmp.eq.s32.totalorder %s15, 3
    %p122 = por %p120, %p121
    %p124 = scmp.ne.s32.totalorder %s107, %s123
    %p125 = scmp.eq.s32.totalorder %s15, 0
    %p126 = por %p124, %p125
    %p127 = scmp.le.s32.totalorder 1, %s9
    %p128 = scmp.lt.s32.totalorder %s9, 5
    %p129 = pnand %p127, %p128
    %p130 = pneg %p129
    // Predicated region
    $region9: #{double_conv_forward.5} parent=5 // pred_check
      _
    $region10: #{double_conv_forward.5} parent=5 // pred_check_branch
      %132 = sbr.rel (%p129) target = $region12
    $region11: #{double_conv_forward.5} parent=5 // pred_region
      %s133 = ssub.s32 %s9, 1
      // Predicated region
      $region13: #{double_conv_forward.5} parent=11 // pred_check
        %p134 = pneg %p70
      $region14: #{double_conv_forward.5} parent=11 // pred_check_branch
        %136 = sbr.rel (%p134) target = $region16
      $region15: #{double_conv_forward.5} parent=11 // pred_region
        _
      $region16: #{double_conv_forward.5} parent=11 // pred_fallthru
        _
      // Predicated region
      $region17: #{double_conv_forward.5} parent=11 // pred_check
        %p137 = pneg %p91
      $region18: #{double_conv_forward.5} parent=11 // pred_check_branch
        %139 = sbr.rel (%p137) target = $region20
      $region19: #{double_conv_forward.5} parent=11 // pred_region
        _
      $region20: #{double_conv_forward.5} parent=11 // pred_fallthru
        _
    $region12: #{double_conv_forward.5} parent=5 // pred_fallthru
      _
    %p140 = scmp.lt.s32.totalorder %s9, 4
    // Predicated region
    $region21: #{double_conv_forward.5} parent=5 // pred_check
      %p141 = pneg %p140
    $region22: #{double_conv_forward.5} parent=5 // pred_check_branch
      %143 = sbr.rel (%p141) target = $region24
    $region23: #{double_conv_forward.5} parent=5 // pred_region
      // Predicated region
      $region25: #{double_conv_forward.5} parent=23 // pred_check
        %p144 = pneg %p43
      $region26: #{double_conv_forward.5} parent=23 // pred_check_branch
        %146 = sbr.rel (%p144) target = $region28
      $region27: #{double_conv_forward.5} parent=23 // pred_region
        %p147 = scmp.lt.s32.totalorder %s16, 1
        %s148 = scalar_select %p147, %s16, 1
        %p149 = scmp.lt.s32.totalorder %s17, 1
        %s150 = scalar_select %p149, %s17, 1
        %s151 = smul.addr %s148, 2
        %s152 = sadd.s32 %s150, %s151
        %s153 = smul.addr %s152, 4
        %s154 = scalar_lea.vmem %s0, %s153
      $region28: #{double_conv_forward.5} parent=23 // pred_fallthru
        _
    $region24: #{double_conv_forward.5} parent=5 // pred_fallthru
      _
    %p155 = scmp.le.s32.totalorder 1, %s9
    %p156 = scmp.lt.s32.totalorder %s9, 5
    %p157 = pnand %p155, %p156
    %p158 = pneg %p157
    // Predicated region
    $region29: #{double_conv_forward.5} parent=5 // pred_check
      _
    $region30: #{double_conv_forward.5} parent=5 // pred_check_branch
      %160 = sbr.rel (%p157) target = $region32
    $region31: #{double_conv_forward.5} parent=5 // pred_region
      %s161 = ssub.s32 %s9, 1
      %p162 = scmp.lt.s32.totalorder %s18, 1
      %s163 = scalar_select %p162, %s18, 1
      %p164 = scmp.lt.s32.totalorder %s19, 1
      %s165 = scalar_select %p164, %s19, 1
      %s166 = smul.addr %s163, 2
      %s167 = sadd.s32 %s165, %s166
      %s168 = smul.addr %s167, 4
      %s169 = scalar_lea.vmem %s0, %s168
      %p170 = pneg %p49
      %p171 = pneg %p46
      %p172 = pneg %p70
      %p173 = pneg %p67
      %p174 = pneg %p91
      %p175 = pneg %p88
      %p176 = pneg %p119
      %p177 = pneg %p116
      %p178 = scmp.lt.s32.totalorder %s18, 1
      %s179 = scalar_select %p178, %s18, 1
      %p180 = scmp.lt.s32.totalorder %s19, 1
      %s181 = scalar_select %p180, %s19, 1
      %s182 = smul.addr %s179, 2
      %s183 = sadd.s32 %s181, %s182
      %s184 = smul.addr %s183, 8
      %s185 = scalar_lea.vmem %s3, %s184
      %p186 = scmp.lt.s32.totalorder %s18, 1
      %s187 = scalar_select %p186, %s18, 1
      %p188 = scmp.lt.s32.totalorder %s19, 1
      %s189 = scalar_select %p188, %s19, 1
      %s190 = smul.addr %s187, 2
      %s191 = sadd.s32 %s189, %s190
      %s192 = smul.addr %s191, 4
      %s193 = scalar_lea.vmem %s0, %s192
      %p194 = scmp.lt.s32.totalorder %s18, 1
      %s195 = scalar_select %p194, %s18, 1
      %p196 = scmp.lt.s32.totalorder %s19, 1
      %s197 = scalar_select %p196, %s19, 1
      %s198 = smul.addr %s195, 2
      %s199 = sadd.s32 %s197, %s198
      %s200 = smul.addr %s199, 8
      %s201 = scalar_lea.vmem %s3, %s200
      %v202 = vld [vmem:[%s193] sm:$0xf]
      %v203 = vunpack.c.l.bf16 %v202
      %v204 = vld [vmem:[%s1] sm:$0x1]
      %v206 = vlaneseq
      %v207 = vshrl.u32 %v206, 7
      %v208 = vsub.s32 0, %v207
      %v209 = vrot.slane %v204, %v208
      %v211 = vmul.f32 %v203, %v209
      %v212 = vld [vmem:[%s2] sm:$0x1]
      %v214 = vlaneseq
      %v215 = vshrl.u32 %v214, 7
      %v216 = vsub.s32 0, %v215
      %v217 = vrot.slane %v212, %v216
      %v219 = vadd.f32 %v211, %v217
      %v220 = vmax.f32 %v219, 0.0
      %221 = vst [vmem:[%s201] sm:$0xff] %v220
      %p222 = scmp.lt.s32.totalorder %s18, 1
      %s223 = scalar_select %p222, %s18, 1
      %p224 = scmp.lt.s32.totalorder %s19, 1
      %s225 = scalar_select %p224, %s19, 1
      %s226 = smul.addr %s223, 2
      %s227 = sadd.s32 %s225, %s226
      %s228 = smul.addr %s227, 8
      %s229 = scalar_lea.vmem %s3, %s228
      // Predicated region
      $region33: #{double_conv_forward.5} parent=31 // pred_check
        %p230 = pneg %p116
      $region34: #{double_conv_forward.5} parent=31 // pred_check_branch
        %232 = sbr.rel (%p230) target = $region36
      $region35: #{double_conv_forward.5} parent=31 // pred_region
        _
      $region36: #{double_conv_forward.5} parent=31 // pred_fallthru
        _
    $region32: #{double_conv_forward.5} parent=5 // pred_fallthru
      _
    %p233 = scmp.le.s32.totalorder 2, %s9
    // Predicated region
    $region37: #{double_conv_forward.5} parent=5 // pred_check
      %p234 = pneg %p233
    $region38: #{double_conv_forward.5} parent=5 // pred_check_branch
      %236 = sbr.rel (%p234) target = $region40
    $region39: #{double_conv_forward.5} parent=5 // pred_region
      %s237 = ssub.s32 %s9, 2
      // Predicated region
      $region41: #{double_conv_forward.5} parent=39 // pred_check
        %p238 = pneg %p122
      $region42: #{double_conv_forward.5} parent=39 // pred_check_branch
        %240 = sbr.rel (%p238) target = $region44
      $region43: #{double_conv_forward.5} parent=39 // pred_region
        %p241 = scmp.lt.s32.totalorder %s20, 1
        %s242 = scalar_select %p241, %s20, 1
        %p243 = scmp.lt.s32.totalorder %s21, 1
        %s244 = scalar_select %p243, %s21, 1
        %s245 = smul.addr %s242, 2
        %s246 = sadd.s32 %s244, %s245
        %s247 = smul.addr %s246, 8
        %s248 = scalar_lea.vmem %s3, %s247
      $region44: #{double_conv_forward.5} parent=39 // pred_fallthru
        _
    $region40: #{double_conv_forward.5} parent=5 // pred_fallthru
      _
  $region6: #{double_conv_forward.5} parent=0 // loop_footer
    %s13 = sadd.s32 1, %s9
  $region7: #{double_conv_forward.5} parent=0 // loop_footer_branch
    %8 = sbr.rel target = $region3
  $region8: #{double_conv_forward.5} parent=0 // loop_exit
    _

</llo_original>
